<compile_context>
chip_gen: v5e
topology: v5e:2x2
jax: 0.10.0
libtpu: 0.0.40
codegen_flags: <defaults>
</compile_context>

<pallas_src>
import functools

import jax
import jax.numpy as jnp
from jax.experimental import pallas as pl
from jax.experimental.pallas import tpu as pltpu

LANE = 128
SUBLANE = 8


def _round_up(x, m):
    return (x + m - 1) // m * m


def _fused_conv_block_kernel(x_ref, w1_ref, b1_ref, w2_ref, b2_ref, o_ref, *, M2p, taps2):
    """Fused Conv3x3->BN->ReLU->Conv3x3->BN->ReLU for one batch element.

    x_ref : (1, M1p, Kp1)    bf16  host-packed im2col patches of conv1 (taps x Cin in lanes)
    w1_ref: (Kp1, Cp2)       bf16  conv1 weights, BN1 scale folded into columns
    b1_ref: (1, Cp2)         f32   folded BN1 bias (conv1 bias absorbed)
    w2_ref: (9, Cp2, Cp2)    bf16  conv2 per-tap weights, BN2 scale folded into columns
    b2_ref: (1, Cp2)         f32   folded BN2 bias (conv2 bias absorbed)
    o_ref : (1, M2p, Cp2)    f32   flat, dense output slab (cropped/reshaped in the wrapper)
    """
    # ---- conv1: one lane-dense K=Kp1 matmul, f32 accumulate, bias + ReLU epilogue ----
    h1 = jnp.dot(x_ref[0], w1_ref[...], preferred_element_type=jnp.float32)   # (M1p, Cp2)
    h1 = jnp.maximum(h1 + b1_ref[...], 0.0).astype(jnp.bfloat16)              # stays in VMEM

    # ---- conv2: 9 accumulating per-tap dots on the VMEM-resident intermediate ----
    # (no im2col materialization; the shift amounts are the flat-grid tap offsets on the
    #  h1 grid of width W1 = W - 2)
    acc = jnp.dot(h1[taps2[0]:taps2[0] + M2p, :], w2_ref[0],
                  preferred_element_type=jnp.float32)                         # (M2p, Cp2)
    for t in range(1, 9):
        d = taps2[t]
        acc = acc + jnp.dot(h1[d:d + M2p, :], w2_ref[t],
                            preferred_element_type=jnp.float32)

    o_ref[...] = jnp.maximum(acc + b2_ref[...], 0.0)[None].astype(o_ref.dtype)


def conv_block_forward(x_nchw, params):
    """Matches conv_block.forward (two VALID 3x3 convs, eval-mode BatchNorm). NCHW in/out."""
    N, Cin, H, W = x_nchw.shape
    Cout = params["conv1_w"].shape[-1]
    H1, W1 = H - 2, W - 2                      # conv1 output grid
    Ho, Wo = H - 4, W - 4                      # conv2 (final) output grid
    Kp1 = _round_up(9 * Cin, LANE)             # lane-dense conv1 K (taps x Cin)
    Cp2 = _round_up(Cout, LANE)                # lane-dense channel count

    # Flat-grid bookkeeping for conv2: output rows cover M2p flat indices of the h1 grid;
    # each tap is a shift by kh*W1+kw, so h1 must be computed with a (2*W1+2)-row halo.
    M2p = _round_up(Ho * W1, SUBLANE)
    taps2 = tuple(kh * W1 + kw for kh in range(3) for kw in range(3))
    d2_max = 2 * W1 + 2
    M1p = _round_up(M2p + d2_max, SUBLANE)
    # Invariants tying taps / halo / crop together (see correctness review):
    #  * every per-tap slice h1[d : d+M2p] stays inside the M1p rows we compute,
    #  * every *valid* (post-crop) conv2 output only reads genuine conv1 outputs
    #    (rows < H1*W1); rows in [H1*W1, M1p) are zero-padded patches and feed only
    #    cropped outputs.
    assert max(taps2) == d2_max and M2p + d2_max <= M1p
    assert (Ho - 1) * W1 + (Wo - 1) + d2_max < H1 * W1 <= M1p

    # ---- host-side im2col for conv1: taps x Cin packed into the lane dimension ----
    x = jnp.transpose(x_nchw, (0, 2, 3, 1))                                  # NHWC
    patches = jnp.concatenate(
        [x[:, kh:kh + H1, kw:kw + W1, :] for kh in range(3) for kw in range(3)],
        axis=-1)                                                             # (N, H1, W1, 9*Cin)
    patches = patches.reshape(N, H1 * W1, 9 * Cin)
    patches = jnp.pad(patches, ((0, 0), (0, M1p - H1 * W1), (0, Kp1 - 9 * Cin)))
    patches = patches.astype(jnp.bfloat16)                                   # (N, M1p, Kp1)

    # ---- fold eval-mode BN: scale into the weight columns, bias (with conv bias) separate ----
    def fold_bn(gamma, beta, mean, var, conv_b, eps=1e-5):
        s = gamma / jnp.sqrt(var + eps)
        b = beta - mean * s + s * conv_b
        return s, b

    s1, b1 = fold_bn(params["bn1_gamma"], params["bn1_beta"],
                     params["bn1_mean"], params["bn1_var"], params["conv1_b"])
    s2, b2 = fold_bn(params["bn2_gamma"], params["bn2_beta"],
                     params["bn2_mean"], params["bn2_var"], params["conv2_b"])

    # conv1 weights: HWIO * s1 -> (9*Cin, Cout) -> zero pad -> bf16
    w1 = (params["conv1_w"] * s1[None, None, None, :]).reshape(9 * Cin, Cout)
    w1 = jnp.pad(w1, ((0, Kp1 - 9 * Cin), (0, Cp2 - Cout))).astype(jnp.bfloat16)

    # conv2 weights: HWIO * s2 -> per-tap (9, Cout, Cout) -> zero pad -> bf16
    w2 = (params["conv2_w"] * s2[None, None, None, :]).reshape(9, Cout, Cout)
    w2 = jnp.pad(w2, ((0, 0), (0, Cp2 - Cout), (0, Cp2 - Cout))).astype(jnp.bfloat16)

    b1 = jnp.pad(b1.astype(jnp.float32), (0, Cp2 - Cout)).reshape(1, Cp2)
    b2 = jnp.pad(b2.astype(jnp.float32), (0, Cp2 - Cout)).reshape(1, Cp2)

    kern = functools.partial(_fused_conv_block_kernel, M2p=M2p, taps2=taps2)

    out = pl.pallas_call(
        kern,
        out_shape=jax.ShapeDtypeStruct((N, M2p, Cp2), jnp.float32),
        grid_spec=pltpu.PrefetchScalarGridSpec(
            num_scalar_prefetch=0,
            grid=(N,),
            in_specs=[
                pl.BlockSpec((1, M1p, Kp1), lambda n: (n, 0, 0)),      # im2col patches
                pl.BlockSpec((Kp1, Cp2), lambda n: (0, 0)),            # w1, VMEM resident
                pl.BlockSpec((1, Cp2), lambda n: (0, 0)),              # b1
                pl.BlockSpec((9, Cp2, Cp2), lambda n: (0, 0, 0)),      # w2, VMEM resident
                pl.BlockSpec((1, Cp2), lambda n: (0, 0)),              # b2
            ],
            out_specs=pl.BlockSpec((1, M2p, Cp2), lambda n: (n, 0, 0)),
        ),
        compiler_params=pltpu.CompilerParams(
            dimension_semantics=("parallel",),
            vmem_limit_bytes=64 * 1024 * 1024),
    )(patches, w1, b1, w2, b2)

    # crop the dense flat slab back to (N, Cout, Ho, Wo) outside the kernel
    y = out[:, :Ho * W1, :Cout].reshape(N, Ho, W1, Cout)[:, :, :Wo, :]
    return jnp.transpose(y, (0, 3, 1, 2))


def _reference_forward(x_nchw, params):
    """Plain-JAX f32 reference (lax conv) for the correctness check."""
    x = jnp.transpose(x_nchw, (0, 2, 3, 1))
    dn = ("NHWC", "HWIO", "NHWC")

    def block(x, w, b, gamma, beta, mean, var):
        y = jax.lax.conv_general_dilated(x, w, (1, 1), "VALID", dimension_numbers=dn)
        y = y + b[None, None, None, :]
        y = (y - mean) / jnp.sqrt(var + 1e-5) * gamma + beta
        return jnp.maximum(y, 0.0)

    y = block(x, params["conv1_w"], params["conv1_b"], params["bn1_gamma"],
              params["bn1_beta"], params["bn1_mean"], params["bn1_var"])
    y = block(y, params["conv2_w"], params["conv2_b"], params["bn2_gamma"],
              params["bn2_beta"], params["bn2_mean"], params["bn2_var"])
    return jnp.transpose(y, (0, 3, 1, 2))


def make_params(key, in_ch, out_ch):
    keys = jax.random.split(key, 8)
    return {
        # HWIO weight layout (PyTorch OIHW would be transposed (2, 3, 1, 0)).
        "conv1_w": 0.1 * jax.random.normal(keys[0], (3, 3, in_ch, out_ch), jnp.float32),
        "conv1_b": 0.1 * jax.random.normal(keys[1], (out_ch,), jnp.float32),
        "conv2_w": 0.1 * jax.random.normal(keys[2], (3, 3, out_ch, out_ch), jnp.float32),
        "conv2_b": 0.1 * jax.random.normal(keys[3], (out_ch,), jnp.float32),
        "bn1_gamma": 1.0 + 0.1 * jax.random.normal(keys[4], (out_ch,), jnp.float32),
        "bn1_beta": 0.1 * jax.random.normal(keys[5], (out_ch,), jnp.float32),
        "bn1_mean": jnp.zeros((out_ch,), jnp.float32),
        "bn1_var": jnp.ones((out_ch,), jnp.float32),
        "bn2_gamma": 1.0 + 0.1 * jax.random.normal(keys[6], (out_ch,), jnp.float32),
        "bn2_beta": 0.1 * jax.random.normal(keys[7], (out_ch,), jnp.float32),
        "bn2_mean": jnp.zeros((out_ch,), jnp.float32),
        "bn2_var": jnp.ones((out_ch,), jnp.float32),
    }


if __name__ == "__main__":
    key = jax.random.PRNGKey(0)
    kx, kp = jax.random.split(key)

    N, in_ch, out_ch, H, W = 2, 4, 8, 16, 16
    x = jax.random.normal(kx, (N, in_ch, H, W), jnp.float32)   # NCHW like PyTorch
    params = make_params(kp, in_ch, out_ch)

    out = jax.block_until_ready(conv_block_forward(x, params))
    ref = jax.block_until_ready(_reference_forward(x, params))

    assert out.shape == (N, out_ch, H - 4, W - 4), out.shape
    max_err = float(jnp.max(jnp.abs(out - ref)))
    # bf16 MXU operands with f32 accumulation -> looser tolerance than pure f32.
    assert max_err < 5e-2, max_err
    print("KERNEL_OK")
</pallas_src>

<mosaic_0001>
module attributes {stable_mosaic.version = 11 : i64} {
  func.func @_fused_conv_block_kernel(%arg0: i32, %arg1: memref<1x200x128xbf16, #tpu.memory_space<vmem>>, %arg2: memref<128x128xbf16, #tpu.memory_space<vmem>>, %arg3: memref<1x128xf32, #tpu.memory_space<vmem>>, %arg4: memref<9x128x128xbf16, #tpu.memory_space<vmem>>, %arg5: memref<1x128xf32, #tpu.memory_space<vmem>>, %arg6: memref<1x168x128xf32, #tpu.memory_space<vmem>>) attributes {dimension_semantics = [#tpu.dimension_semantics<parallel>], iteration_bounds = array<i64: 2>, scalar_prefetch = 0 : i64, scratch_operands = 0 : i64, tpu.core_type = #tpu.core_type<tc>, window_params = [{transform_indices = @transform_0, window_bounds = array<i64: 1, 200, 128>}, {pipeline_mode = #tpu.pipeline_mode<synchronous>, transform_indices = @transform_1, window_bounds = array<i64: 128, 128>}, {pipeline_mode = #tpu.pipeline_mode<synchronous>, transform_indices = @transform_2, window_bounds = array<i64: 1, 128>}, {pipeline_mode = #tpu.pipeline_mode<synchronous>, transform_indices = @transform_3, window_bounds = array<i64: 9, 128, 128>}, {pipeline_mode = #tpu.pipeline_mode<synchronous>, transform_indices = @transform_4, window_bounds = array<i64: 1, 128>}, {transform_indices = @transform_5, window_bounds = array<i64: 1, 168, 128>}]} {
    %c0 = arith.constant 0 : index
    %c0_0 = arith.constant 0 : index
    %c0_1 = arith.constant 0 : index
    %0 = vector.load %arg1[%c0, %c0_0, %c0_1] : memref<1x200x128xbf16, #tpu.memory_space<vmem>>, vector<1x200x128xbf16>
    %1 = vector.shape_cast %0 : vector<1x200x128xbf16> to vector<200x128xbf16>
    %c0_2 = arith.constant 0 : index
    %c0_3 = arith.constant 0 : index
    %2 = vector.load %arg2[%c0_2, %c0_3] : memref<128x128xbf16, #tpu.memory_space<vmem>>, vector<128x128xbf16>
    %cst = arith.constant dense<0.000000e+00> : vector<200x128xf32>
    %3 = tpu.matmul %1, %2, %cst {dimension_numbers = #tpu.dot_dimension_numbers<[1], [0], [0], [1], [0, 0, 1, 1], [], []>} : vector<200x128xbf16>, vector<128x128xbf16>, vector<200x128xf32> -> vector<200x128xf32>
    %c0_4 = arith.constant 0 : index
    %c0_5 = arith.constant 0 : index
    %4 = vector.load %arg3[%c0_4, %c0_5] : memref<1x128xf32, #tpu.memory_space<vmem>>, vector<1x128xf32>
    %5 = vector.broadcast %4 : vector<1x128xf32> to vector<200x128xf32>
    %6 = arith.addf %3, %5 : vector<200x128xf32>
    %cst_6 = arith.constant 0.000000e+00 : f32
    %7 = vector.broadcast %cst_6 : f32 to vector<200x128xf32>
    %8 = arith.maximumf %6, %7 : vector<200x128xf32>
    %9 = arith.truncf %8 : vector<200x128xf32> to vector<200x128xbf16>
    %10 = vector.extract_strided_slice %9 {offsets = [0, 0], sizes = [168, 128], strides = [1, 1]} : vector<200x128xbf16> to vector<168x128xbf16>
    %c0_7 = arith.constant 0 : index
    %c0_8 = arith.constant 0 : index
    %c0_9 = arith.constant 0 : index
    %11 = vector.load %arg4[%c0_7, %c0_8, %c0_9] : memref<9x128x128xbf16, #tpu.memory_space<vmem>>, vector<1x128x128xbf16>
    %12 = vector.shape_cast %11 : vector<1x128x128xbf16> to vector<128x128xbf16>
    %cst_10 = arith.constant dense<0.000000e+00> : vector<168x128xf32>
    %13 = tpu.matmul %10, %12, %cst_10 {dimension_numbers = #tpu.dot_dimension_numbers<[1], [0], [0], [1], [0, 0, 1, 1], [], []>} : vector<168x128xbf16>, vector<128x128xbf16>, vector<168x128xf32> -> vector<168x128xf32>
    %14 = vector.extract_strided_slice %9 {offsets = [1, 0], sizes = [168, 128], strides = [1, 1]} : vector<200x128xbf16> to vector<168x128xbf16>
    %c1 = arith.constant 1 : index
    %c0_11 = arith.constant 0 : index
    %c0_12 = arith.constant 0 : index
    %15 = vector.load %arg4[%c1, %c0_11, %c0_12] : memref<9x128x128xbf16, #tpu.memory_space<vmem>>, vector<1x128x128xbf16>
    %16 = vector.shape_cast %15 : vector<1x128x128xbf16> to vector<128x128xbf16>
    %cst_13 = arith.constant dense<0.000000e+00> : vector<168x128xf32>
    %17 = tpu.matmul %14, %16, %cst_13 {dimension_numbers = #tpu.dot_dimension_numbers<[1], [0], [0], [1], [0, 0, 1, 1], [], []>} : vector<168x128xbf16>, vector<128x128xbf16>, vector<168x128xf32> -> vector<168x128xf32>
    %18 = arith.addf %13, %17 : vector<168x128xf32>
    %19 = vector.extract_strided_slice %9 {offsets = [2, 0], sizes = [168, 128], strides = [1, 1]} : vector<200x128xbf16> to vector<168x128xbf16>
    %c2 = arith.constant 2 : index
    %c0_14 = arith.constant 0 : index
    %c0_15 = arith.constant 0 : index
    %20 = vector.load %arg4[%c2, %c0_14, %c0_15] : memref<9x128x128xbf16, #tpu.memory_space<vmem>>, vector<1x128x128xbf16>
    %21 = vector.shape_cast %20 : vector<1x128x128xbf16> to vector<128x128xbf16>
    %cst_16 = arith.constant dense<0.000000e+00> : vector<168x128xf32>
    %22 = tpu.matmul %19, %21, %cst_16 {dimension_numbers = #tpu.dot_dimension_numbers<[1], [0], [0], [1], [0, 0, 1, 1], [], []>} : vector<168x128xbf16>, vector<128x128xbf16>, vector<168x128xf32> -> vector<168x128xf32>
    %23 = arith.addf %18, %22 : vector<168x128xf32>
    %24 = vector.extract_strided_slice %9 {offsets = [14, 0], sizes = [168, 128], strides = [1, 1]} : vector<200x128xbf16> to vector<168x128xbf16>
    %c3 = arith.constant 3 : index
    %c0_17 = arith.constant 0 : index
    %c0_18 = arith.constant 0 : index
    %25 = vector.load %arg4[%c3, %c0_17, %c0_18] : memref<9x128x128xbf16, #tpu.memory_space<vmem>>, vector<1x128x128xbf16>
    %26 = vector.shape_cast %25 : vector<1x128x128xbf16> to vector<128x128xbf16>
    %cst_19 = arith.constant dense<0.000000e+00> : vector<168x128xf32>
    %27 = tpu.matmul %24, %26, %cst_19 {dimension_numbers = #tpu.dot_dimension_numbers<[1], [0], [0], [1], [0, 0, 1, 1], [], []>} : vector<168x128xbf16>, vector<128x128xbf16>, vector<168x128xf32> -> vector<168x128xf32>
    %28 = arith.addf %23, %27 : vector<168x128xf32>
    %29 = vector.extract_strided_slice %9 {offsets = [15, 0], sizes = [168, 128], strides = [1, 1]} : vector<200x128xbf16> to vector<168x128xbf16>
    %c4 = arith.constant 4 : index
    %c0_20 = arith.constant 0 : index
    %c0_21 = arith.constant 0 : index
    %30 = vector.load %arg4[%c4, %c0_20, %c0_21] : memref<9x128x128xbf16, #tpu.memory_space<vmem>>, vector<1x128x128xbf16>
    %31 = vector.shape_cast %30 : vector<1x128x128xbf16> to vector<128x128xbf16>
    %cst_22 = arith.constant dense<0.000000e+00> : vector<168x128xf32>
    %32 = tpu.matmul %29, %31, %cst_22 {dimension_numbers = #tpu.dot_dimension_numbers<[1], [0], [0], [1], [0, 0, 1, 1], [], []>} : vector<168x128xbf16>, vector<128x128xbf16>, vector<168x128xf32> -> vector<168x128xf32>
    %33 = arith.addf %28, %32 : vector<168x128xf32>
    %34 = vector.extract_strided_slice %9 {offsets = [16, 0], sizes = [168, 128], strides = [1, 1]} : vector<200x128xbf16> to vector<168x128xbf16>
    %c5 = arith.constant 5 : index
    %c0_23 = arith.constant 0 : index
    %c0_24 = arith.constant 0 : index
    %35 = vector.load %arg4[%c5, %c0_23, %c0_24] : memref<9x128x128xbf16, #tpu.memory_space<vmem>>, vector<1x128x128xbf16>
    %36 = vector.shape_cast %35 : vector<1x128x128xbf16> to vector<128x128xbf16>
    %cst_25 = arith.constant dense<0.000000e+00> : vector<168x128xf32>
    %37 = tpu.matmul %34, %36, %cst_25 {dimension_numbers = #tpu.dot_dimension_numbers<[1], [0], [0], [1], [0, 0, 1, 1], [], []>} : vector<168x128xbf16>, vector<128x128xbf16>, vector<168x128xf32> -> vector<168x128xf32>
    %38 = arith.addf %33, %37 : vector<168x128xf32>
    %39 = vector.extract_strided_slice %9 {offsets = [28, 0], sizes = [168, 128], strides = [1, 1]} : vector<200x128xbf16> to vector<168x128xbf16>
    %c6 = arith.constant 6 : index
    %c0_26 = arith.constant 0 : index
    %c0_27 = arith.constant 0 : index
    %40 = vector.load %arg4[%c6, %c0_26, %c0_27] : memref<9x128x128xbf16, #tpu.memory_space<vmem>>, vector<1x128x128xbf16>
    %41 = vector.shape_cast %40 : vector<1x128x128xbf16> to vector<128x128xbf16>
    %cst_28 = arith.constant dense<0.000000e+00> : vector<168x128xf32>
    %42 = tpu.matmul %39, %41, %cst_28 {dimension_numbers = #tpu.dot_dimension_numbers<[1], [0], [0], [1], [0, 0, 1, 1], [], []>} : vector<168x128xbf16>, vector<128x128xbf16>, vector<168x128xf32> -> vector<168x128xf32>
    %43 = arith.addf %38, %42 : vector<168x128xf32>
    %44 = vector.extract_strided_slice %9 {offsets = [29, 0], sizes = [168, 128], strides = [1, 1]} : vector<200x128xbf16> to vector<168x128xbf16>
    %c7 = arith.constant 7 : index
    %c0_29 = arith.constant 0 : index
    %c0_30 = arith.constant 0 : index
    %45 = vector.load %arg4[%c7, %c0_29, %c0_30] : memref<9x128x128xbf16, #tpu.memory_space<vmem>>, vector<1x128x128xbf16>
    %46 = vector.shape_cast %45 : vector<1x128x128xbf16> to vector<128x128xbf16>
    %cst_31 = arith.constant dense<0.000000e+00> : vector<168x128xf32>
    %47 = tpu.matmul %44, %46, %cst_31 {dimension_numbers = #tpu.dot_dimension_numbers<[1], [0], [0], [1], [0, 0, 1, 1], [], []>} : vector<168x128xbf16>, vector<128x128xbf16>, vector<168x128xf32> -> vector<168x128xf32>
    %48 = arith.addf %43, %47 : vector<168x128xf32>
    %49 = vector.extract_strided_slice %9 {offsets = [30, 0], sizes = [168, 128], strides = [1, 1]} : vector<200x128xbf16> to vector<168x128xbf16>
    %c8 = arith.constant 8 : index
    %c0_32 = arith.constant 0 : index
    %c0_33 = arith.constant 0 : index
    %50 = vector.load %arg4[%c8, %c0_32, %c0_33] : memref<9x128x128xbf16, #tpu.memory_space<vmem>>, vector<1x128x128xbf16>
    %51 = vector.shape_cast %50 : vector<1x128x128xbf16> to vector<128x128xbf16>
    %cst_34 = arith.constant dense<0.000000e+00> : vector<168x128xf32>
    %52 = tpu.matmul %49, %51, %cst_34 {dimension_numbers = #tpu.dot_dimension_numbers<[1], [0], [0], [1], [0, 0, 1, 1], [], []>} : vector<168x128xbf16>, vector<128x128xbf16>, vector<168x128xf32> -> vector<168x128xf32>
    %53 = arith.addf %48, %52 : vector<168x128xf32>
    %c0_35 = arith.constant 0 : index
    %c0_36 = arith.constant 0 : index
    %54 = vector.load %arg5[%c0_35, %c0_36] : memref<1x128xf32, #tpu.memory_space<vmem>>, vector<1x128xf32>
    %55 = vector.broadcast %54 : vector<1x128xf32> to vector<168x128xf32>
    %56 = arith.addf %53, %55 : vector<168x128xf32>
    %cst_37 = arith.constant 0.000000e+00 : f32
    %57 = vector.broadcast %cst_37 : f32 to vector<168x128xf32>
    %58 = arith.maximumf %56, %57 : vector<168x128xf32>
    %59 = vector.shape_cast %58 : vector<168x128xf32> to vector<1x168x128xf32>
    %c0_38 = arith.constant 0 : index
    %c0_39 = arith.constant 0 : index
    %c0_40 = arith.constant 0 : index
    %60 = vector.load %arg6[%c0_38, %c0_39, %c0_40] : memref<1x168x128xf32, #tpu.memory_space<vmem>>, vector<1x168x128xf32>
    tpu.vector_store %arg6[%c0_38, %c0_39, %c0_40], %59 {strides = array<i32>} : memref<1x168x128xf32, #tpu.memory_space<vmem>>, vector<1x168x128xf32>,
    return
  }
  func.func @transform_0(%arg0: i32) -> (i32, i32, i32) {
    %c0_i32 = arith.constant 0 : i32
    %c0_i32_0 = arith.constant 0 : i32
    %c0_i32_1 = arith.constant 0 : i32
    return %arg0, %c0_i32, %c0_i32_0 : i32, i32, i32
  }
  func.func @transform_1(%arg0: i32) -> (i32, i32) {
    %c0_i32 = arith.constant 0 : i32
    %c0_i32_0 = arith.constant 0 : i32
    %c0_i32_1 = arith.constant 0 : i32
    return %c0_i32, %c0_i32_0 : i32, i32
  }
  func.func @transform_2(%arg0: i32) -> (i32, i32) {
    %c0_i32 = arith.constant 0 : i32
    %c0_i32_0 = arith.constant 0 : i32
    %c0_i32_1 = arith.constant 0 : i32
    return %c0_i32, %c0_i32_0 : i32, i32
  }
  func.func @transform_3(%arg0: i32) -> (i32, i32, i32) {
    %c0_i32 = arith.constant 0 : i32
    %c0_i32_0 = arith.constant 0 : i32
    %c0_i32_1 = arith.constant 0 : i32
    %c0_i32_2 = arith.constant 0 : i32
    return %c0_i32, %c0_i32_0, %c0_i32_1 : i32, i32, i32
  }
  func.func @transform_4(%arg0: i32) -> (i32, i32) {
    %c0_i32 = arith.constant 0 : i32
    %c0_i32_0 = arith.constant 0 : i32
    %c0_i32_1 = arith.constant 0 : i32
    return %c0_i32, %c0_i32_0 : i32, i32
  }
  func.func @transform_5(%arg0: i32) -> (i32, i32, i32) {
    %c0_i32 = arith.constant 0 : i32
    %c0_i32_0 = arith.constant 0 : i32
    %c0_i32_1 = arith.constant 0 : i32
    return %arg0, %c0_i32, %c0_i32_0 : i32, i32, i32
  }
}

</mosaic_0001>

<llo_original>
// kernel: tpu_custom_call.1
$region0: #{tpu_custom_call.1}
  #allocation0 [shape = 'u32[]', space=smem, size = 0x4, offset = 0x4, fixed_abs, tag = 'smem constant byte address 0x4 - core index']
  #allocation1 [shape = 'u32[72,128]{1,0:T(1,128)}', space=vmem, size = 0x9000, scoped, tag = 'internal scratch']
  %s0 = inlined_call_operand.hbm [shape: bf16[2,200,128], index: 0, kind: input, shape index: {}]
  %s1 = inlined_call_operand.hbm [shape: bf16[128,128], index: 1, kind: input, shape index: {}]
  %s2 = inlined_call_operand.vmem [shape: f32[1,128], index: 2, kind: input, shape index: {}]
  %s3 = inlined_call_operand.hbm [shape: bf16[9,128,128], index: 3, kind: input, shape index: {}]
  %s4 = inlined_call_operand.vmem [shape: f32[1,128], index: 4, kind: input, shape index: {}]
  %s5 = inlined_call_operand.hbm [shape: f32[2,168,128], index: 5, kind: output, shape index: {}]
  %s6 = sld [smem:[#allocation0]]
  $region65: #{tpu_custom_call.1} parent=0
    _
  %s8 = ssub.s32 1, %s6
  %s9 = scalar_select 0, %s8, %s6
  $region1: #{tpu_custom_call.1} parent=0
    #allocation2 [shape = 'u8[102400]{0}', space=vmem, size = 0x19000, scoped, tag = 'input window, operand 0']
    #allocation3 [shape = 's32[2]{0}', space=sflag, size = 0x8, scoped, tag = 'scoped memory for tpu_custom_call.1']
    #allocation4 [shape = 's32[2]{0}', space=sflag, size = 0x8, scoped, tag = 'scoped memory for tpu_custom_call.1']
    #allocation5 [shape = 'u8[32768]{0}', space=vmem, size = 0x8000, scoped, tag = 'input window, operand 1, single buffered']
    #allocation6 [shape = 's32[1]{0}', space=sflag, size = 0x4, scoped, tag = 'scoped memory for tpu_custom_call.1']
    #allocation7 [shape = 'u8[294912]{0}', space=vmem, size = 0x48000, scoped, tag = 'input window, operand 3, single buffered']
    #allocation8 [shape = 'u8[172032]{0}', space=vmem, size = 0x2a000, scoped, tag = 'output window, operand 0']
    %10 = vsyncpa [#allocation3], 0
    %s11 = scalar_lea.sflag [#allocation3], 1
    %12 = vsyncpa %s11, 0
    %13 = vsyncpa [#allocation6], 0
    %14 = vsyncpa [#allocation4], 0
    %s15 = scalar_lea.sflag [#allocation4], 1
    %16 = vsyncpa %s15, 0
    loop: start=0, step=1, limit=4
    $region2: #{tpu_custom_call.1} parent=1 // loop_pre_header
      _
    $region3: #{tpu_custom_call.1} parent=1 // loop_header
      %s18 = sphi 0, %s22
      %p19 = scmp.ge.s32.totalorder %s18, 4
      %s28 = sphi 0, %s30
      %s31 = sphi 0, %s28
      %s32 = sphi 0, %s31
      %s48 = sphi 0, %s32
      %s52 = sphi 0, %s52
      %s54 = sphi 0, %s52
      %s55 = sphi 0, %s54
      %s69 = sphi 0, %s55
      %s73 = sphi 0, %s73
      %s75 = sphi 0, %s73
      %s76 = sphi 0, %s75
      %s90 = sphi 0, %s76
      %s94 = sphi 0, %s94
      %s96 = sphi 0, %s94
      %s97 = sphi 0, %s96
      %s111 = sphi 0, %s97
      %s115 = sphi 0, %s115
      %s117 = sphi 0, %s115
      %s118 = sphi 0, %s117
      %s132 = sphi 0, %s118
      %s138 = sphi 0, %s140
      %s141 = sphi 0, %s138
      %s142 = sphi 0, %s141
      %s158 = sphi 0, %s142
    $region4: #{tpu_custom_call.1} parent=1 // loop_header_branch
      %21 = sbr.rel (%p19) target = $region8
    $region5: #{tpu_custom_call.1} parent=1 // loop_body
      %s23 = ssub.s32 %s18, 1
      %s24 = ssub.s32 %s18, 2
      %s25 = sadd.s32 %s18, 1
      %s26 = ssub.s32 %s18, %s25
      %p27 = scmp.eq.s32.totalorder %s26, 0
      %s29 = sadd.s32 %s28, 1
      %s30 = scalar_select %p27, %s28, %s29
      %p33 = pneg %p27
      %p34 = scmp.eq.s32.totalorder %s18, 1
      %p35 = por %p33, %p34
      %p36 = scmp.ne.s32.totalorder %s28, %s31
      %p37 = scmp.eq.s32.totalorder %s18, 0
      %p38 = por %p36, %p37
      %p39 = scmp.ne.s32.totalorder %s28, %s31
      %p40 = scmp.eq.s32.totalorder %s23, 1
      %p41 = por %p39, %p40
      %p42 = scmp.ne.s32.totalorder %s31, %s32
      %p43 = scmp.eq.s32.totalorder %s23, 0
      %p44 = por %p42, %p43
      %p45 = scmp.ne.s32.totalorder %s31, %s32
      %p46 = scmp.eq.s32.totalorder %s24, 1
      %p47 = por %p45, %p46
      %p49 = scmp.ne.s32.totalorder %s32, %s48
      %p50 = scmp.eq.s32.totalorder %s24, 0
      %p51 = por %p49, %p50
      %s53 = sadd.s32 %s52, 1
      %p56 = scmp.eq.s32.totalorder %s18, 1
      %p57 = scmp.ne.s32.totalorder %s52, %s54
      %p58 = scmp.eq.s32.totalorder %s18, 0
      %p59 = por %p57, %p58
      %p60 = scmp.ne.s32.totalorder %s52, %s54
      %p61 = scmp.eq.s32.totalorder %s23, 1
      %p62 = por %p60, %p61
      %p63 = scmp.ne.s32.totalorder %s54, %s55
      %p64 = scmp.eq.s32.totalorder %s23, 0
      %p65 = por %p63, %p64
      %p66 = scmp.ne.s32.totalorder %s54, %s55
      %p67 = scmp.eq.s32.totalorder %s24, 1
      %p68 = por %p66, %p67
      %p70 = scmp.ne.s32.totalorder %s55, %s69
      %p71 = scmp.eq.s32.totalorder %s24, 0
      %p72 = por %p70, %p71
      %s74 = sadd.s32 %s73, 1
      %p77 = scmp.eq.s32.totalorder %s18, 1
      %p78 = scmp.ne.s32.totalorder %s73, %s75
      %p79 = scmp.eq.s32.totalorder %s18, 0
      %p80 = por %p78, %p79
      %p81 = scmp.ne.s32.totalorder %s73, %s75
      %p82 = scmp.eq.s32.totalorder %s23, 1
      %p83 = por %p81, %p82
      %p84 = scmp.ne.s32.totalorder %s75, %s76
      %p85 = scmp.eq.s32.totalorder %s23, 0
      %p86 = por %p84, %p85
      %p87 = scmp.ne.s32.totalorder %s75, %s76
      %p88 = scmp.eq.s32.totalorder %s24, 1
      %p89 = por %p87, %p88
      %p91 = scmp.ne.s32.totalorder %s76, %s90
      %p92 = scmp.eq.s32.totalorder %s24, 0
      %p93 = por %p91, %p92
      %s95 = sadd.s32 %s94, 1
      %p98 = scmp.eq.s32.totalorder %s18, 1
      %p99 = scmp.ne.s32.totalorder %s94, %s96
      %p100 = scmp.eq.s32.totalorder %s18, 0
      %p101 = por %p99, %p100
      %p102 = scmp.ne.s32.totalorder %s94, %s96
      %p103 = scmp.eq.s32.totalorder %s23, 1
      %p104 = por %p102, %p103
      %p105 = scmp.ne.s32.totalorder %s96, %s97
      %p106 = scmp.eq.s32.totalorder %s23, 0
      %p107 = por %p105, %p106
      %p108 = scmp.ne.s32.totalorder %s96, %s97
      %p109 = scmp.eq.s32.totalorder %s24, 1
      %p110 = por %p108, %p109
      %p112 = scmp.ne.s32.totalorder %s97, %s111
      %p113 = scmp.eq.s32.totalorder %s24, 0
      %p114 = por %p112, %p113
      %s116 = sadd.s32 %s115, 1
      %p119 = scmp.eq.s32.totalorder %s18, 1
      %p120 = scmp.ne.s32.totalorder %s115, %s117
      %p121 = scmp.eq.s32.totalorder %s18, 0
      %p122 = por %p120, %p121
      %p123 = scmp.ne.s32.totalorder %s115, %s117
      %p124 = scmp.eq.s32.totalorder %s23, 1
      %p125 = por %p123, %p124
      %p126 = scmp.ne.s32.totalorder %s117, %s118
      %p127 = scmp.eq.s32.totalorder %s23, 0
      %p128 = por %p126, %p127
      %p129 = scmp.ne.s32.totalorder %s117, %s118
      %p130 = scmp.eq.s32.totalorder %s24, 1
      %p131 = por %p129, %p130
      %p133 = scmp.ne.s32.totalorder %s118, %s132
      %p134 = scmp.eq.s32.totalorder %s24, 0
      %p135 = por %p133, %p134
      %s136 = ssub.s32 %s18, %s25
      %p137 = scmp.eq.s32.totalorder %s136, 0
      %s139 = sadd.s32 %s138, 1
      %s140 = scalar_select %p137, %s138, %s139
      %p143 = pneg %p137
      %p144 = scmp.eq.s32.totalorder %s18, 1
      %p145 = por %p143, %p144
      %p146 = scmp.ne.s32.totalorder %s138, %s141
      %p147 = scmp.eq.s32.totalorder %s18, 0
      %p148 = por %p146, %p147
      %p149 = scmp.ne.s32.totalorder %s138, %s141
      %p150 = scmp.eq.s32.totalorder %s23, 1
      %p151 = por %p149, %p150
      %p152 = scmp.ne.s32.totalorder %s141, %s142
      %p153 = scmp.eq.s32.totalorder %s23, 0
      %p154 = por %p152, %p153
      %p155 = scmp.ne.s32.totalorder %s141, %s142
      %p156 = scmp.eq.s32.totalorder %s24, 1
      %p157 = por %p155, %p156
      %p159 = scmp.ne.s32.totalorder %s142, %s158
      %p160 = scmp.eq.s32.totalorder %s24, 0
      %p161 = por %p159, %p160
      %p162 = scmp.le.s32.totalorder 1, %s18
      %p163 = scmp.lt.s32.totalorder %s18, 3
      %p164 = pnand %p162, %p163
      %p165 = pneg %p164
      // Predicated region
      $region9: #{tpu_custom_call.1} parent=5 // pred_check
        _
      $region10: #{tpu_custom_call.1} parent=5 // pred_check_branch
        %167 = sbr.rel (%p164) target = $region12
      $region11: #{tpu_custom_call.1} parent=5 // pred_region
        %s168 = ssub.s32 %s18, 1
        // Predicated region
        $region13: #{tpu_custom_call.1} parent=11 // pred_check
          %p169 = pneg %p65
        $region14: #{tpu_custom_call.1} parent=11 // pred_check_branch
          %171 = sbr.rel (%p169) target = $region16
        $region15: #{tpu_custom_call.1} parent=11 // pred_region
          %173 = vsyncadd [#allocation6], 0
          %s174 = sshll.u32 %s1, 4
          %s175 = int_to_ptr.hbm [resolvable:$true] %s174
          %s176 = sshll.u32 [#allocation5], 4
          %s177 = int_to_ptr.vmem [resolvable:$true] %s176
          %182 = dma.hbm_to_vmem [thread:$0]  %s175, 1024, %s177, [#allocation6], 64, 64, 4
        $region16: #{tpu_custom_call.1} parent=11 // pred_fallthru
          _
        // Predicated region
        $region17: #{tpu_custom_call.1} parent=11 // pred_check
          %p183 = pneg %p86
        $region18: #{tpu_custom_call.1} parent=11 // pred_check_branch
          %185 = sbr.rel (%p183) target = $region20
        $region19: #{tpu_custom_call.1} parent=11 // pred_region
          _
        $region20: #{tpu_custom_call.1} parent=11 // pred_fallthru
          _
        // Predicated region
        $region21: #{tpu_custom_call.1} parent=11 // pred_check
          %p186 = pneg %p107
        $region22: #{tpu_custom_call.1} parent=11 // pred_check_branch
          %188 = sbr.rel (%p186) target = $region24
        $region23: #{tpu_custom_call.1} parent=11 // pred_region
          %190 = vsyncadd [#allocation6], 0
          %s191 = sshll.u32 %s3, 4
          %s192 = int_to_ptr.hbm [resolvable:$true] %s191
          %s193 = sshll.u32 [#allocation7], 4
          %s194 = int_to_ptr.vmem [resolvable:$true] %s193
          %199 = dma.hbm_to_vmem [thread:$0]  %s192, 9216, %s194, [#allocation6], 64, 64, 4
        $region24: #{tpu_custom_call.1} parent=11 // pred_fallthru
          _
        // Predicated region
        $region25: #{tpu_custom_call.1} parent=11 // pred_check
          %p200 = pneg %p128
        $region26: #{tpu_custom_call.1} parent=11 // pred_check_branch
          %202 = sbr.rel (%p200) target = $region28
        $region27: #{tpu_custom_call.1} parent=11 // pred_region
          _
        $region28: #{tpu_custom_call.1} parent=11 // pred_fallthru
          _
      $region12: #{tpu_custom_call.1} parent=5 // pred_fallthru
        _
      %p203 = scmp.lt.s32.totalorder %s18, 2
      // Predicated region
      $region29: #{tpu_custom_call.1} parent=5 // pred_check
        %p204 = pneg %p203
      $region30: #{tpu_custom_call.1} parent=5 // pred_check_branch
        %206 = sbr.rel (%p204) target = $region32
      $region31: #{tpu_custom_call.1} parent=5 // pred_region
        // Predicated region
        $region33: #{tpu_custom_call.1} parent=31 // pred_check
          %p207 = pneg %p38
        $region34: #{tpu_custom_call.1} parent=31 // pred_check_branch
          %209 = sbr.rel (%p207) target = $region36
        $region35: #{tpu_custom_call.1} parent=31 // pred_region
          %s210 = sand.u32 %s28, 1
          %s211 = scalar_lea.sflag [#allocation3], %s210
          %s212 = sand.u32 %s28, 1
          %s213 = smul.addr %s212, 100
          %s214 = scalar_lea.vmem [#allocation2], %s213
          %216 = vsyncadd %s211, 0
          %s217 = smul.addr %s18, 25
          %s218 = smul.addr %s217, 4
          %s219 = scalar_lea.hbm %s0, %s218
          %s220 = sshll.u32 %s219, 4
          %s221 = int_to_ptr.hbm [resolvable:$true] %s220
          %s222 = sshll.u32 %s214, 4
          %s223 = int_to_ptr.vmem [resolvable:$true] %s222
          %228 = dma.hbm_to_vmem [thread:$0]  %s221, 1600, %s223, %s211, 64, 64, 4
        $region36: #{tpu_custom_call.1} parent=31 // pred_fallthru
          _
      $region32: #{tpu_custom_call.1} parent=5 // pred_fallthru
        _
      %p229 = scmp.le.s32.totalorder 1, %s18
      %p230 = scmp.lt.s32.totalorder %s18, 3
      %p231 = pnand %p229, %p230
      %p232 = pneg %p231
      // Predicated region
      $region37: #{tpu_custom_call.1} parent=5 // pred_check
        _
      $region38: #{tpu_custom_call.1} parent=5 // pred_check_branch
        %234 = sbr.rel (%p231) target = $region40
      $region39: #{tpu_custom_call.1} parent=5 // pred_region
        %s235 = ssub.s32 %s18, 1
        %s236 = sand.u32 %s31, 1
        %s237 = scalar_lea.sflag [#allocation3], %s236
        %s238 = sand.u32 %s31, 1
        %s239 = smul.addr %s238, 100
        %s240 = scalar_lea.vmem [#allocation2], %s239
        // Predicated region
        $region41: #{tpu_custom_call.1} parent=39 // pred_check
          %p241 = pneg %p44
        $region42: #{tpu_custom_call.1} parent=39 // pred_check_branch
          %243 = sbr.rel (%p241) target = $region44
        $region43: #{tpu_custom_call.1} parent=39 // pred_region
          %245 = dma.done %s237, 1600
        $region44: #{tpu_custom_call.1} parent=39 // pred_fallthru
          _
        // Predicated region
        $region45: #{tpu_custom_call.1} parent=39 // pred_check
          %p246 = pneg %p65
        $region46: #{tpu_custom_call.1} parent=39 // pred_check_branch
          %248 = sbr.rel (%p246) target = $region48
        $region47: #{tpu_custom_call.1} parent=39 // pred_region
          %250 = dma.done [#allocation6], 1024
        $region48: #{tpu_custom_call.1} parent=39 // pred_fallthru
          _
        // Predicated region
        $region49: #{tpu_custom_call.1} parent=39 // pred_check
          %p251 = pneg %p107
        $region50: #{tpu_custom_call.1} parent=39 // pred_check_branch
          %253 = sbr.rel (%p251) target = $region52
        $region51: #{tpu_custom_call.1} parent=39 // pred_region
          %255 = dma.done [#allocation6], 9216
        $region52: #{tpu_custom_call.1} parent=39 // pred_fallthru
          _
        %s256 = sand.u32 %s31, 1
        %s257 = scalar_lea.sflag [#allocation3], %s256
        %s258 = sand.u32 %s31, 1
        %s259 = smul.addr %s258, 100
        %s260 = scalar_lea.vmem [#allocation2], %s259
        %p261 = pneg %p44
        %p262 = pneg %p41
        %p263 = pneg %p65
        %p264 = pneg %p62
        %p265 = pneg %p86
        %p266 = pneg %p83
        %p267 = pneg %p107
        %p268 = pneg %p104
        %p269 = pneg %p128
        %p270 = pneg %p125
        %p271 = pneg %p154
        %p272 = pneg %p151
        %s273 = sand.u32 %s141, 1
        %s274 = scalar_lea.sflag [#allocation4], %s273
        %s275 = sand.u32 %s141, 1
        %s276 = smul.addr %s275, 168
        %s277 = scalar_lea.vmem [#allocation8], %s276
        %v278 = vld [vmem:[%s240] sm:$0xf]
        %v279 = vld [vmem:[%s240 + $0x4] sm:$0xf]
        %v280 = vld [vmem:[%s240 + $0x8] sm:$0xf]
        %v281 = vld [vmem:[%s240 + $0xc] sm:$0xf]
        %v282 = vld [vmem:[%s240 + $0x10] sm:$0xf]
        %v283 = vld [vmem:[%s240 + $0x14] sm:$0xf]
        %v284 = vld [vmem:[%s240 + $0x18] sm:$0xf]
        %v285 = vld [vmem:[%s240 + $0x1c] sm:$0xf]
        %v286 = vld [vmem:[%s240 + $0x20] sm:$0xf]
        %v287 = vld [vmem:[%s240 + $0x24] sm:$0xf]
        %v288 = vld [vmem:[%s240 + $0x28] sm:$0xf]
        %v289 = vld [vmem:[%s240 + $0x2c] sm:$0xf]
        %v290 = vld [vmem:[%s240 + $0x30] sm:$0xf]
        %v291 = vld [vmem:[%s240 + $0x34] sm:$0xf]
        %v292 = vld [vmem:[%s240 + $0x38] sm:$0xf]
        %v293 = vld [vmem:[%s240 + $0x3c] sm:$0xf]
        %v294 = vld [vmem:[%s240 + $0x40] sm:$0xf]
        %v295 = vld [vmem:[%s240 + $0x44] sm:$0xf]
        %v296 = vld [vmem:[%s240 + $0x48] sm:$0xf]
        %v297 = vld [vmem:[%s240 + $0x4c] sm:$0xf]
        %v298 = vld [vmem:[%s240 + $0x50] sm:$0xf]
        %v299 = vld [vmem:[%s240 + $0x54] sm:$0xf]
        %v300 = vld [vmem:[%s240 + $0x58] sm:$0xf]
        %v301 = vld [vmem:[%s240 + $0x5c] sm:$0xf]
        %v302 = vld [vmem:[%s240 + $0x60] sm:$0xf]
        %v303 = vld [vmem:[#allocation5] sm:$0xf]
        %v304 = vld [vmem:[#allocation5 + $0x4] sm:$0xf]
        %v305 = vld [vmem:[#allocation5 + $0x8] sm:$0xf]
        %v306 = vld [vmem:[#allocation5 + $0xc] sm:$0xf]
        %v307 = vld [vmem:[#allocation5 + $0x10] sm:$0xf]
        %v308 = vld [vmem:[#allocation5 + $0x14] sm:$0xf]
        %v309 = vld [vmem:[#allocation5 + $0x18] sm:$0xf]
        %v310 = vld [vmem:[#allocation5 + $0x1c] sm:$0xf]
        %v311 = vld [vmem:[#allocation5 + $0x20] sm:$0xf]
        %v312 = vld [vmem:[#allocation5 + $0x24] sm:$0xf]
        %v313 = vld [vmem:[#allocation5 + $0x28] sm:$0xf]
        %v314 = vld [vmem:[#allocation5 + $0x2c] sm:$0xf]
        %v315 = vld [vmem:[#allocation5 + $0x30] sm:$0xf]
        %v316 = vld [vmem:[#allocation5 + $0x34] sm:$0xf]
        %v317 = vld [vmem:[#allocation5 + $0x38] sm:$0xf]
        %v318 = vld [vmem:[#allocation5 + $0x3c] sm:$0xf]
        %v319 = vld [vmem:[%s2] sm:$0x1]
        %v321 = vperm.slane %v319, 0
        %v348 = vunpack.c.l.b16 %v278
        %v349 = vunpack.c.l.b16 %v279
        %v350 = vunpack.c.l.b16 %v280
        %v351 = vunpack.c.l.b16 %v281
        %v352 = vunpack.c.l.b16 %v282
        %v353 = vunpack.c.l.b16 %v283
        %v354 = vunpack.c.l.b16 %v284
        %v355 = vunpack.c.l.b16 %v285
        %v356 = vunpack.c.l.b16 %v286
        %v357 = vunpack.c.l.b16 %v287
        %v358 = vunpack.c.l.b16 %v288
        %v359 = vunpack.c.l.b16 %v289
        %v360 = vunpack.c.l.b16 %v290
        %v361 = vunpack.c.l.b16 %v291
        %v362 = vunpack.c.l.b16 %v292
        %v363 = vunpack.c.l.b16 %v293
        %v364 = vunpack.c.l.b16 %v294
        %v365 = vunpack.c.l.b16 %v295
        %v366 = vunpack.c.l.b16 %v296
        %v367 = vunpack.c.l.b16 %v297
        %v368 = vunpack.c.l.b16 %v298
        %v369 = vunpack.c.l.b16 %v299
        %v370 = vunpack.c.l.b16 %v300
        %v371 = vunpack.c.l.b16 %v301
        %v372 = vunpack.c.l.b16 %v302
        %v373 = vpack.c.b16 %v349, %v348
        %v374 = vpack.c.b16 %v351, %v350
        %v375 = vpack.c.b16 %v353, %v352
        %v376 = vpack.c.b16 %v355, %v354
        %v377 = vpack.c.b16 %v357, %v356
        %v378 = vpack.c.b16 %v359, %v358
        %v379 = vpack.c.b16 %v361, %v360
        %v380 = vpack.c.b16 %v363, %v362
        %v381 = vpack.c.b16 %v365, %v364
        %v382 = vpack.c.b16 %v367, %v366
        %v383 = vpack.c.b16 %v369, %v368
        %v384 = vpack.c.b16 %v371, %v370
        %v385 = vpack.c.b16 %v372, %v372
        %v415 = vunpack.c.l.b16 %v303
        %v416 = vunpack.c.l.b16 %v304
        %v417 = vunpack.c.l.b16 %v305
        %v418 = vunpack.c.l.b16 %v306
        %v419 = vunpack.c.l.b16 %v307
        %v420 = vunpack.c.l.b16 %v308
        %v421 = vunpack.c.l.b16 %v309
        %v422 = vunpack.c.l.b16 %v310
        %v423 = vunpack.c.l.b16 %v311
        %v424 = vunpack.c.l.b16 %v312
        %v425 = vunpack.c.l.b16 %v313
        %v426 = vunpack.c.l.b16 %v314
        %v427 = vunpack.c.l.b16 %v315
        %v428 = vunpack.c.l.b16 %v316
        %v429 = vunpack.c.l.b16 %v317
        %v430 = vunpack.c.l.b16 %v318
        %v431 = vpack.c.b16 %v416, %v415
        %v432 = vpack.c.b16 %v418, %v417
        %v433 = vpack.c.b16 %v420, %v419
        %v434 = vpack.c.b16 %v422, %v421
        %v435 = vpack.c.b16 %v424, %v423
        %v436 = vpack.c.b16 %v426, %v425
        %v437 = vpack.c.b16 %v428, %v427
        %v438 = vpack.c.b16 %v430, %v429
        %447 = vmatpush.bf16.msra.mxu0 %v438
        %448 = vmatpush.bf16.msra.mxu0 %v437
        %449 = vmatpush.bf16.msra.mxu0 %v436
        %450 = vmatpush.bf16.msra.mxu0 %v435
        %451 = vmatpush.bf16.msra.mxu0 %v434
        %452 = vmatpush.bf16.msra.mxu0 %v433
        %453 = vmatpush.bf16.msra.mxu0 %v432
        %454 = vmatpush.bf16.msra.mxu0 %v431
        %455 = vmatmul.bf16.gmra.mxu0 %v373
        %v456 = vpop.f32.mrf.mxu0
        %v457 = vadd.f32 %v321, %v456
        %v458 = vpop.f32.mrf.mxu0
        %v459 = vadd.f32 %v321, %v458
        %460 = vmatmul.bf16.gmra.mxu0 %v374
        %v461 = vpop.f32.mrf.mxu0
        %v462 = vadd.f32 %v321, %v461
        %v463 = vpop.f32.mrf.mxu0
        %v464 = vadd.f32 %v321, %v463
        %465 = vmatmul.bf16.gmra.mxu0 %v375
        %v466 = vpop.f32.mrf.mxu0
        %v467 = vadd.f32 %v321, %v466
        %v468 = vpop.f32.mrf.mxu0
        %v469 = vadd.f32 %v321, %v468
        %470 = vmatmul.bf16.gmra.mxu0 %v376
        %v471 = vpop.f32.mrf.mxu0
        %v472 = vadd.f32 %v321, %v471
        %v473 = vpop.f32.mrf.mxu0
        %v474 = vadd.f32 %v321, %v473
        %475 = vmatmul.bf16.gmra.mxu0 %v377
        %v476 = vpop.f32.mrf.mxu0
        %v477 = vadd.f32 %v321, %v476
        %v478 = vpop.f32.mrf.mxu0
        %v479 = vadd.f32 %v321, %v478
        %480 = vmatmul.bf16.gmra.mxu0 %v378
        %v481 = vpop.f32.mrf.mxu0
        %v482 = vadd.f32 %v321, %v481
        %v483 = vpop.f32.mrf.mxu0
        %v484 = vadd.f32 %v321, %v483
        %485 = vmatmul.bf16.gmra.mxu0 %v379
        %v486 = vpop.f32.mrf.mxu0
        %v487 = vadd.f32 %v321, %v486
        %v488 = vpop.f32.mrf.mxu0
        %v489 = vadd.f32 %v321, %v488
        %490 = vmatmul.bf16.gmra.mxu0 %v380
        %v491 = vpop.f32.mrf.mxu0
        %v492 = vadd.f32 %v321, %v491
        %v493 = vpop.f32.mrf.mxu0
        %v494 = vadd.f32 %v321, %v493
        %495 = vmatmul.bf16.gmra.mxu0 %v381
        %v496 = vpop.f32.mrf.mxu0
        %v497 = vadd.f32 %v321, %v496
        %v498 = vpop.f32.mrf.mxu0
        %v499 = vadd.f32 %v321, %v498
        %500 = vmatmul.bf16.gmra.mxu0 %v382
        %v501 = vpop.f32.mrf.mxu0
        %v502 = vadd.f32 %v321, %v501
        %v503 = vpop.f32.mrf.mxu0
        %v504 = vadd.f32 %v321, %v503
        %505 = vmatmul.bf16.gmra.mxu0 %v383
        %v506 = vpop.f32.mrf.mxu0
        %v507 = vadd.f32 %v321, %v506
        %v508 = vpop.f32.mrf.mxu0
        %v509 = vadd.f32 %v321, %v508
        %510 = vmatmul.bf16.gmra.mxu0 %v384
        %v511 = vpop.f32.mrf.mxu0
        %v512 = vadd.f32 %v321, %v511
        %v513 = vpop.f32.mrf.mxu0
        %v514 = vadd.f32 %v321, %v513
        %515 = vmatmul.bf16.gmra.mxu0 %v385
        %v516 = vpop.f32.mrf.mxu0
        %v517 = vadd.f32 %v321, %v516
        %v518 = vpop.f32.mrf.mxu0
        %519 = vdwg.mxu0
        %v520 = vmax.f32 %v457, 0.0
        %v521 = vmax.f32 %v459, 0.0
        %v522 = vmax.f32 %v462, 0.0
        %v523 = vmax.f32 %v464, 0.0
        %v524 = vmax.f32 %v467, 0.0
        %v525 = vmax.f32 %v469, 0.0
        %v526 = vmax.f32 %v472, 0.0
        %v527 = vmax.f32 %v474, 0.0
        %v528 = vmax.f32 %v477, 0.0
        %v529 = vmax.f32 %v479, 0.0
        %v530 = vmax.f32 %v482, 0.0
        %v531 = vmax.f32 %v484, 0.0
        %v532 = vmax.f32 %v487, 0.0
        %v533 = vmax.f32 %v489, 0.0
        %v534 = vmax.f32 %v492, 0.0
        %v535 = vmax.f32 %v494, 0.0
        %v536 = vmax.f32 %v497, 0.0
        %v537 = vmax.f32 %v499, 0.0
        %v538 = vmax.f32 %v502, 0.0
        %v539 = vmax.f32 %v504, 0.0
        %v540 = vmax.f32 %v507, 0.0
        %v541 = vmax.f32 %v509, 0.0
        %v542 = vmax.f32 %v512, 0.0
        %v543 = vmax.f32 %v514, 0.0
        %v544 = vmax.f32 %v517, 0.0
        %v545 = vpack.c.bf16 %v520, %v520
        %v546 = vpack.c.bf16 %v521, %v521
        %v547 = vpack.c.bf16 %v522, %v522
        %v548 = vpack.c.bf16 %v523, %v523
        %v549 = vpack.c.bf16 %v524, %v524
        %v550 = vpack.c.bf16 %v525, %v525
        %v551 = vpack.c.bf16 %v526, %v526
        %v552 = vpack.c.bf16 %v527, %v527
        %v553 = vpack.c.bf16 %v528, %v528
        %v554 = vpack.c.bf16 %v529, %v529
        %v555 = vpack.c.bf16 %v530, %v530
        %v556 = vpack.c.bf16 %v531, %v531
        %v557 = vpack.c.bf16 %v532, %v532
        %v558 = vpack.c.bf16 %v533, %v533
        %v559 = vpack.c.bf16 %v534, %v534
        %v560 = vpack.c.bf16 %v535, %v535
        %v561 = vpack.c.bf16 %v536, %v536
        %v562 = vpack.c.bf16 %v537, %v537
        %v563 = vpack.c.bf16 %v538, %v538
        %v564 = vpack.c.bf16 %v539, %v539
        %v565 = vpack.c.bf16 %v540, %v540
        %v566 = vpack.c.bf16 %v541, %v541
        %v567 = vpack.c.bf16 %v542, %v542
        %v568 = vpack.c.bf16 %v543, %v543
        %v569 = vpack.c.bf16 %v544, %v544
        %v570 = vld [vmem:[#allocation7] sm:$0xf]
        %v571 = vld [vmem:[#allocation7 + $0x4] sm:$0xf]
        %v572 = vld [vmem:[#allocation7 + $0x8] sm:$0xf]
        %v573 = vld [vmem:[#allocation7 + $0xc] sm:$0xf]
        %v574 = vld [vmem:[#allocation7 + $0x10] sm:$0xf]
        %v575 = vld [vmem:[#allocation7 + $0x14] sm:$0xf]
        %v576 = vld [vmem:[#allocation7 + $0x18] sm:$0xf]
        %v577 = vld [vmem:[#allocation7 + $0x1c] sm:$0xf]
        %v578 = vld [vmem:[#allocation7 + $0x20] sm:$0xf]
        %v579 = vld [vmem:[#allocation7 + $0x24] sm:$0xf]
        %v580 = vld [vmem:[#allocation7 + $0x28] sm:$0xf]
        %v581 = vld [vmem:[#allocation7 + $0x2c] sm:$0xf]
        %v582 = vld [vmem:[#allocation7 + $0x30] sm:$0xf]
        %v583 = vld [vmem:[#allocation7 + $0x34] sm:$0xf]
        %v584 = vld [vmem:[#allocation7 + $0x38] sm:$0xf]
        %v585 = vld [vmem:[#allocation7 + $0x3c] sm:$0xf]
        %s586 = scalar_lea.vmem [#allocation7], 64
        %v587 = vld [vmem:[%s586] sm:$0xf]
        %v588 = vld [vmem:[%s586 + $0x4] sm:$0xf]
        %v589 = vld [vmem:[%s586 + $0x8] sm:$0xf]
        %v590 = vld [vmem:[%s586 + $0xc] sm:$0xf]
        %v591 = vld [vmem:[%s586 + $0x10] sm:$0xf]
        %v592 = vld [vmem:[%s586 + $0x14] sm:$0xf]
        %v593 = vld [vmem:[%s586 + $0x18] sm:$0xf]
        %v594 = vld [vmem:[%s586 + $0x1c] sm:$0xf]
        %v595 = vld [vmem:[%s586 + $0x20] sm:$0xf]
        %v596 = vld [vmem:[%s586 + $0x24] sm:$0xf]
        %v597 = vld [vmem:[%s586 + $0x28] sm:$0xf]
        %v598 = vld [vmem:[%s586 + $0x2c] sm:$0xf]
        %v599 = vld [vmem:[%s586 + $0x30] sm:$0xf]
        %v600 = vld [vmem:[%s586 + $0x34] sm:$0xf]
        %v601 = vld [vmem:[%s586 + $0x38] sm:$0xf]
        %v602 = vld [vmem:[%s586 + $0x3c] sm:$0xf]
        %v625 = vunpack.c.l.b16 %v545
        %v626 = vunpack.c.l.b16 %v546
        %v627 = vunpack.c.l.b16 %v547
        %v628 = vunpack.c.l.b16 %v548
        %v629 = vunpack.c.l.b16 %v549
        %v630 = vunpack.c.l.b16 %v550
        %v631 = vunpack.c.l.b16 %v551
        %v632 = vunpack.c.l.b16 %v552
        %v633 = vunpack.c.l.b16 %v553
        %v634 = vunpack.c.l.b16 %v554
        %v635 = vunpack.c.l.b16 %v555
        %v636 = vunpack.c.l.b16 %v556
        %v637 = vunpack.c.l.b16 %v557
        %v638 = vunpack.c.l.b16 %v558
        %v639 = vunpack.c.l.b16 %v559
        %v640 = vunpack.c.l.b16 %v560
        %v641 = vunpack.c.l.b16 %v561
        %v642 = vunpack.c.l.b16 %v562
        %v643 = vunpack.c.l.b16 %v563
        %v644 = vunpack.c.l.b16 %v564
        %v645 = vunpack.c.l.b16 %v565
        %v646 = vunpack.c.l.b16 %v566
        %v647 = vpack.c.b16 %v626, %v625
        %v648 = vpack.c.b16 %v628, %v627
        %v649 = vpack.c.b16 %v630, %v629
        %v650 = vpack.c.b16 %v632, %v631
        %v651 = vpack.c.b16 %v634, %v633
        %v652 = vpack.c.b16 %v636, %v635
        %v653 = vpack.c.b16 %v638, %v637
        %v654 = vpack.c.b16 %v640, %v639
        %v655 = vpack.c.b16 %v642, %v641
        %v656 = vpack.c.b16 %v644, %v643
        %v657 = vpack.c.b16 %v646, %v645
        %vm658 = vsmask.f32 7424
        %v660 = vshrl.u32 %v647, 16
        %v662 = vshll.u32 %v647, 16
        %v664 = vrot.slane %v662, 1
        %v665 = vor.u32 %v660, %v664
        %v667 = vshll.u32 %v648, 16
        %v669 = vrot.slane %v667, 1
        %v670 = vsel %vm658, %v665, %v669
        %v671 = vshrl.u32 %v648, 16
        %v673 = vor.u32 %v671, %v669
        %v675 = vshll.u32 %v649, 16
        %v677 = vrot.slane %v675, 1
        %v678 = vsel %vm658, %v673, %v677
        %v679 = vshrl.u32 %v649, 16
        %v681 = vor.u32 %v679, %v677
        %v683 = vshll.u32 %v650, 16
        %v685 = vrot.slane %v683, 1
        %v686 = vsel %vm658, %v681, %v685
        %v687 = vshrl.u32 %v650, 16
        %v689 = vor.u32 %v687, %v685
        %v691 = vshll.u32 %v651, 16
        %v693 = vrot.slane %v691, 1
        %v694 = vsel %vm658, %v689, %v693
        %v695 = vshrl.u32 %v651, 16
        %v697 = vor.u32 %v695, %v693
        %v699 = vshll.u32 %v652, 16
        %v701 = vrot.slane %v699, 1
        %v702 = vsel %vm658, %v697, %v701
        %v703 = vshrl.u32 %v652, 16
        %v705 = vor.u32 %v703, %v701
        %v707 = vshll.u32 %v653, 16
        %v709 = vrot.slane %v707, 1
        %v710 = vsel %vm658, %v705, %v709
        %v711 = vshrl.u32 %v653, 16
        %v713 = vor.u32 %v711, %v709
        %v715 = vshll.u32 %v654, 16
        %v717 = vrot.slane %v715, 1
        %v718 = vsel %vm658, %v713, %v717
        %v719 = vshrl.u32 %v654, 16
        %v721 = vor.u32 %v719, %v717
        %v723 = vshll.u32 %v655, 16
        %v725 = vrot.slane %v723, 1
        %v726 = vsel %vm658, %v721, %v725
        %v727 = vshrl.u32 %v655, 16
        %v729 = vor.u32 %v727, %v725
        %v731 = vshll.u32 %v656, 16
        %v733 = vrot.slane %v731, 1
        %v734 = vsel %vm658, %v729, %v733
        %v735 = vshrl.u32 %v656, 16
        %v737 = vor.u32 %v735, %v733
        %v739 = vshll.u32 %v657, 16
        %v741 = vrot.slane %v739, 1
        %v742 = vsel %vm658, %v737, %v741
        %v743 = vshrl.u32 %v657, 16
        %v745 = vor.u32 %v743, %v741
        %v773 = vunpack.c.l.b16 %v587
        %v774 = vunpack.c.l.b16 %v588
        %v775 = vunpack.c.l.b16 %v589
        %v776 = vunpack.c.l.b16 %v590
        %v777 = vunpack.c.l.b16 %v591
        %v778 = vunpack.c.l.b16 %v592
        %v779 = vunpack.c.l.b16 %v593
        %v780 = vunpack.c.l.b16 %v594
        %v781 = vunpack.c.l.b16 %v595
        %v782 = vunpack.c.l.b16 %v596
        %v783 = vunpack.c.l.b16 %v597
        %v784 = vunpack.c.l.b16 %v598
        %v785 = vunpack.c.l.b16 %v599
        %v786 = vunpack.c.l.b16 %v600
        %v787 = vunpack.c.l.b16 %v601
        %v788 = vunpack.c.l.b16 %v602
        %v789 = vpack.c.b16 %v774, %v773
        %v790 = vpack.c.b16 %v776, %v775
        %v791 = vpack.c.b16 %v778, %v777
        %v792 = vpack.c.b16 %v780, %v779
        %v793 = vpack.c.b16 %v782, %v781
        %v794 = vpack.c.b16 %v784, %v783
        %v795 = vpack.c.b16 %v786, %v785
        %v796 = vpack.c.b16 %v788, %v787
        %805 = vmatpush.bf16.msra.mxu0 %v796
        %806 = vmatpush.bf16.msra.mxu0 %v795
        %807 = vmatpush.bf16.msra.mxu0 %v794
        %808 = vmatpush.bf16.msra.mxu0 %v793
        %809 = vmatpush.bf16.msra.mxu0 %v792
        %810 = vmatpush.bf16.msra.mxu0 %v791
        %811 = vmatpush.bf16.msra.mxu0 %v790
        %812 = vmatpush.bf16.msra.mxu0 %v789
        %813 = vmatmul.bf16.gmra.mxu0 %v670
        %v814 = vpop.f32.mrf.mxu0
        %v815 = vadd.f32 0.0, %v814
        %v816 = vpop.f32.mrf.mxu0
        %v817 = vadd.f32 0.0, %v816
        %818 = vmatmul.bf16.gmra.mxu0 %v678
        %v819 = vpop.f32.mrf.mxu0
        %v820 = vadd.f32 0.0, %v819
        %v821 = vpop.f32.mrf.mxu0
        %v822 = vadd.f32 0.0, %v821
        %823 = vmatmul.bf16.gmra.mxu0 %v686
        %v824 = vpop.f32.mrf.mxu0
        %v825 = vadd.f32 0.0, %v824
        %v826 = vpop.f32.mrf.mxu0
        %v827 = vadd.f32 0.0, %v826
        %828 = vmatmul.bf16.gmra.mxu0 %v694
        %v829 = vpop.f32.mrf.mxu0
        %v830 = vadd.f32 0.0, %v829
        %v831 = vpop.f32.mrf.mxu0
        %v832 = vadd.f32 0.0, %v831
        %833 = vmatmul.bf16.gmra.mxu0 %v702
        %v834 = vpop.f32.mrf.mxu0
        %v835 = vadd.f32 0.0, %v834
        %v836 = vpop.f32.mrf.mxu0
        %v837 = vadd.f32 0.0, %v836
        %838 = vmatmul.bf16.gmra.mxu0 %v710
        %v839 = vpop.f32.mrf.mxu0
        %v840 = vadd.f32 0.0, %v839
        %v841 = vpop.f32.mrf.mxu0
        %v842 = vadd.f32 0.0, %v841
        %843 = vmatmul.bf16.gmra.mxu0 %v718
        %v844 = vpop.f32.mrf.mxu0
        %v845 = vadd.f32 0.0, %v844
        %v846 = vpop.f32.mrf.mxu0
        %v847 = vadd.f32 0.0, %v846
        %848 = vmatmul.bf16.gmra.mxu0 %v726
        %v849 = vpop.f32.mrf.mxu0
        %v850 = vadd.f32 0.0, %v849
        %v851 = vpop.f32.mrf.mxu0
        %v852 = vadd.f32 0.0, %v851
        %853 = vmatmul.bf16.gmra.mxu0 %v734
        %v854 = vpop.f32.mrf.mxu0
        %v855 = vadd.f32 0.0, %v854
        %v856 = vpop.f32.mrf.mxu0
        %v857 = vadd.f32 0.0, %v856
        %858 = vmatmul.bf16.gmra.mxu0 %v742
        %v859 = vpop.f32.mrf.mxu0
        %v860 = vadd.f32 0.0, %v859
        %v861 = vpop.f32.mrf.mxu0
        %v862 = vadd.f32 0.0, %v861
        %863 = vmatmul.bf16.gmra.mxu0 %v745
        %v864 = vpop.f32.mrf.mxu0
        %v865 = vadd.f32 0.0, %v864
        %v866 = vpop.f32.mrf.mxu0
        %867 = vdwg.mxu0
        %v868 = vpack.c.b16 %v645, %v645
        %v896 = vunpack.c.l.b16 %v570
        %v897 = vunpack.c.l.b16 %v571
        %v898 = vunpack.c.l.b16 %v572
        %v899 = vunpack.c.l.b16 %v573
        %v900 = vunpack.c.l.b16 %v574
        %v901 = vunpack.c.l.b16 %v575
        %v902 = vunpack.c.l.b16 %v576
        %v903 = vunpack.c.l.b16 %v577
        %v904 = vunpack.c.l.b16 %v578
        %v905 = vunpack.c.l.b16 %v579
        %v906 = vunpack.c.l.b16 %v580
        %v907 = vunpack.c.l.b16 %v581
        %v908 = vunpack.c.l.b16 %v582
        %v909 = vunpack.c.l.b16 %v583
        %v910 = vunpack.c.l.b16 %v584
        %v911 = vunpack.c.l.b16 %v585
        %v912 = vpack.c.b16 %v897, %v896
        %v913 = vpack.c.b16 %v899, %v898
        %v914 = vpack.c.b16 %v901, %v900
        %v915 = vpack.c.b16 %v903, %v902
        %v916 = vpack.c.b16 %v905, %v904
        %v917 = vpack.c.b16 %v907, %v906
        %v918 = vpack.c.b16 %v909, %v908
        %v919 = vpack.c.b16 %v911, %v910
        %928 = vmatpush.bf16.msra.mxu0 %v919
        %929 = vmatpush.bf16.msra.mxu0 %v918
        %930 = vmatpush.bf16.msra.mxu0 %v917
        %931 = vmatpush.bf16.msra.mxu0 %v916
        %932 = vmatpush.bf16.msra.mxu0 %v915
        %933 = vmatpush.bf16.msra.mxu0 %v914
        %934 = vmatpush.bf16.msra.mxu0 %v913
        %935 = vmatpush.bf16.msra.mxu0 %v912
        %936 = vmatmul.bf16.gmra.mxu0 %v647
        %v937 = vpop.f32.mrf.mxu0
        %v938 = vadd.f32 %v815, %v937
        %v939 = vpop.f32.mrf.mxu0
        %v940 = vadd.f32 %v817, %v939
        %941 = vmatmul.bf16.gmra.mxu0 %v648
        %v942 = vpop.f32.mrf.mxu0
        %v943 = vadd.f32 %v820, %v942
        %v944 = vpop.f32.mrf.mxu0
        %v945 = vadd.f32 %v822, %v944
        %946 = vmatmul.bf16.gmra.mxu0 %v649
        %v947 = vpop.f32.mrf.mxu0
        %v948 = vadd.f32 %v825, %v947
        %v949 = vpop.f32.mrf.mxu0
        %v950 = vadd.f32 %v827, %v949
        %951 = vmatmul.bf16.gmra.mxu0 %v650
        %v952 = vpop.f32.mrf.mxu0
        %v953 = vadd.f32 %v830, %v952
        %v954 = vpop.f32.mrf.mxu0
        %v955 = vadd.f32 %v832, %v954
        %956 = vmatmul.bf16.gmra.mxu0 %v651
        %v957 = vpop.f32.mrf.mxu0
        %v958 = vadd.f32 %v835, %v957
        %v959 = vpop.f32.mrf.mxu0
        %v960 = vadd.f32 %v837, %v959
        %961 = vmatmul.bf16.gmra.mxu0 %v652
        %v962 = vpop.f32.mrf.mxu0
        %v963 = vadd.f32 %v840, %v962
        %v964 = vpop.f32.mrf.mxu0
        %v965 = vadd.f32 %v842, %v964
        %966 = vmatmul.bf16.gmra.mxu0 %v653
        %v967 = vpop.f32.mrf.mxu0
        %v968 = vadd.f32 %v845, %v967
        %v969 = vpop.f32.mrf.mxu0
        %v970 = vadd.f32 %v847, %v969
        %971 = vmatmul.bf16.gmra.mxu0 %v654
        %v972 = vpop.f32.mrf.mxu0
        %v973 = vadd.f32 %v850, %v972
        %v974 = vpop.f32.mrf.mxu0
        %v975 = vadd.f32 %v852, %v974
        %976 = vmatmul.bf16.gmra.mxu0 %v655
        %v977 = vpop.f32.mrf.mxu0
        %v978 = vadd.f32 %v855, %v977
        %v979 = vpop.f32.mrf.mxu0
        %v980 = vadd.f32 %v857, %v979
        %981 = vmatmul.bf16.gmra.mxu0 %v656
        %v982 = vpop.f32.mrf.mxu0
        %v983 = vadd.f32 %v860, %v982
        %v984 = vpop.f32.mrf.mxu0
        %v985 = vadd.f32 %v862, %v984
        %986 = vmatmul.bf16.gmra.mxu0 %v868
        %v987 = vpop.f32.mrf.mxu0
        %v988 = vadd.f32 %v865, %v987
        %v989 = vpop.f32.mrf.mxu0
        %990 = vdwg.mxu0
        %s991 = scalar_lea.vmem [#allocation7], 128
        %v992 = vld [vmem:[%s991] sm:$0xf]
        %v993 = vld [vmem:[%s991 + $0x4] sm:$0xf]
        %v994 = vld [vmem:[%s991 + $0x8] sm:$0xf]
        %v995 = vld [vmem:[%s991 + $0xc] sm:$0xf]
        %v996 = vld [vmem:[%s991 + $0x10] sm:$0xf]
        %v997 = vld [vmem:[%s991 + $0x14] sm:$0xf]
        %v998 = vld [vmem:[%s991 + $0x18] sm:$0xf]
        %v999 = vld [vmem:[%s991 + $0x1c] sm:$0xf]
        %v1000 = vld [vmem:[%s991 + $0x20] sm:$0xf]
        %v1001 = vld [vmem:[%s991 + $0x24] sm:$0xf]
        %v1002 = vld [vmem:[%s991 + $0x28] sm:$0xf]
        %v1003 = vld [vmem:[%s991 + $0x2c] sm:$0xf]
        %v1004 = vld [vmem:[%s991 + $0x30] sm:$0xf]
        %v1005 = vld [vmem:[%s991 + $0x34] sm:$0xf]
        %v1006 = vld [vmem:[%s991 + $0x38] sm:$0xf]
        %v1007 = vld [vmem:[%s991 + $0x3c] sm:$0xf]
        %vm1008 = vcmask 1046528
        %v1009 = vrot.slane %v647, 1
        %v1010 = vrot.slane %v648, 1
        %v1011 = vsel %vm1008, %v1009, %v1010
        %v1012 = vrot.slane %v649, 1
        %v1013 = vsel %vm1008, %v1010, %v1012
        %v1014 = vrot.slane %v650, 1
        %v1015 = vsel %vm1008, %v1012, %v1014
        %v1016 = vrot.slane %v651, 1
        %v1017 = vsel %vm1008, %v1014, %v1016
        %v1018 = vrot.slane %v652, 1
        %v1019 = vsel %vm1008, %v1016, %v1018
        %v1020 = vrot.slane %v653, 1
        %v1021 = vsel %vm1008, %v1018, %v1020
        %v1022 = vrot.slane %v654, 1
        %v1023 = vsel %vm1008, %v1020, %v1022
        %v1024 = vrot.slane %v655, 1
        %v1025 = vsel %vm1008, %v1022, %v1024
        %v1026 = vrot.slane %v656, 1
        %v1027 = vsel %vm1008, %v1024, %v1026
        %v1028 = vrot.slane %v657, 1
        %v1029 = vsel %vm1008, %v1026, %v1028
        %v1057 = vunpack.c.l.b16 %v992
        %v1058 = vunpack.c.l.b16 %v993
        %v1059 = vunpack.c.l.b16 %v994
        %v1060 = vunpack.c.l.b16 %v995
        %v1061 = vunpack.c.l.b16 %v996
        %v1062 = vunpack.c.l.b16 %v997
        %v1063 = vunpack.c.l.b16 %v998
        %v1064 = vunpack.c.l.b16 %v999
        %v1065 = vunpack.c.l.b16 %v1000
        %v1066 = vunpack.c.l.b16 %v1001
        %v1067 = vunpack.c.l.b16 %v1002
        %v1068 = vunpack.c.l.b16 %v1003
        %v1069 = vunpack.c.l.b16 %v1004
        %v1070 = vunpack.c.l.b16 %v1005
        %v1071 = vunpack.c.l.b16 %v1006
        %v1072 = vunpack.c.l.b16 %v1007
        %v1073 = vpack.c.b16 %v1058, %v1057
        %v1074 = vpack.c.b16 %v1060, %v1059
        %v1075 = vpack.c.b16 %v1062, %v1061
        %v1076 = vpack.c.b16 %v1064, %v1063
        %v1077 = vpack.c.b16 %v1066, %v1065
        %v1078 = vpack.c.b16 %v1068, %v1067
        %v1079 = vpack.c.b16 %v1070, %v1069
        %v1080 = vpack.c.b16 %v1072, %v1071
        %1089 = vmatpush.bf16.msra.mxu0 %v1080
        %1090 = vmatpush.bf16.msra.mxu0 %v1079
        %1091 = vmatpush.bf16.msra.mxu0 %v1078
        %1092 = vmatpush.bf16.msra.mxu0 %v1077
        %1093 = vmatpush.bf16.msra.mxu0 %v1076
        %1094 = vmatpush.bf16.msra.mxu0 %v1075
        %1095 = vmatpush.bf16.msra.mxu0 %v1074
        %1096 = vmatpush.bf16.msra.mxu0 %v1073
        %1097 = vmatmul.bf16.gmra.mxu0 %v1011
        %v1098 = vpop.f32.mrf.mxu0
        %v1099 = vadd.f32 0.0, %v1098
        %v1100 = vpop.f32.mrf.mxu0
        %v1101 = vadd.f32 0.0, %v1100
        %1102 = vmatmul.bf16.gmra.mxu0 %v1013
        %v1103 = vpop.f32.mrf.mxu0
        %v1104 = vadd.f32 0.0, %v1103
        %v1105 = vpop.f32.mrf.mxu0
        %v1106 = vadd.f32 0.0, %v1105
        %1107 = vmatmul.bf16.gmra.mxu0 %v1015
        %v1108 = vpop.f32.mrf.mxu0
        %v1109 = vadd.f32 0.0, %v1108
        %v1110 = vpop.f32.mrf.mxu0
        %v1111 = vadd.f32 0.0, %v1110
        %1112 = vmatmul.bf16.gmra.mxu0 %v1017
        %v1113 = vpop.f32.mrf.mxu0
        %v1114 = vadd.f32 0.0, %v1113
        %v1115 = vpop.f32.mrf.mxu0
        %v1116 = vadd.f32 0.0, %v1115
        %1117 = vmatmul.bf16.gmra.mxu0 %v1019
        %v1118 = vpop.f32.mrf.mxu0
        %v1119 = vadd.f32 0.0, %v1118
        %v1120 = vpop.f32.mrf.mxu0
        %v1121 = vadd.f32 0.0, %v1120
        %1122 = vmatmul.bf16.gmra.mxu0 %v1021
        %v1123 = vpop.f32.mrf.mxu0
        %v1124 = vadd.f32 0.0, %v1123
        %v1125 = vpop.f32.mrf.mxu0
        %v1126 = vadd.f32 0.0, %v1125
        %1127 = vmatmul.bf16.gmra.mxu0 %v1023
        %v1128 = vpop.f32.mrf.mxu0
        %v1129 = vadd.f32 0.0, %v1128
        %v1130 = vpop.f32.mrf.mxu0
        %v1131 = vadd.f32 0.0, %v1130
        %1132 = vmatmul.bf16.gmra.mxu0 %v1025
        %v1133 = vpop.f32.mrf.mxu0
        %v1134 = vadd.f32 0.0, %v1133
        %v1135 = vpop.f32.mrf.mxu0
        %v1136 = vadd.f32 0.0, %v1135
        %1137 = vmatmul.bf16.gmra.mxu0 %v1027
        %v1138 = vpop.f32.mrf.mxu0
        %v1139 = vadd.f32 0.0, %v1138
        %v1140 = vpop.f32.mrf.mxu0
        %v1141 = vadd.f32 0.0, %v1140
        %1142 = vmatmul.bf16.gmra.mxu0 %v1029
        %v1143 = vpop.f32.mrf.mxu0
        %v1144 = vadd.f32 0.0, %v1143
        %v1145 = vpop.f32.mrf.mxu0
        %v1146 = vadd.f32 0.0, %v1145
        %1147 = vmatmul.bf16.gmra.mxu0 %v1028
        %v1148 = vpop.f32.mrf.mxu0
        %v1149 = vadd.f32 0.0, %v1148
        %v1150 = vpop.f32.mrf.mxu0
        %1151 = vdwg.mxu0
        %v1152 = vadd.f32 %v938, %v1099
        %v1153 = vadd.f32 %v940, %v1101
        %v1154 = vadd.f32 %v943, %v1104
        %v1155 = vadd.f32 %v945, %v1106
        %v1156 = vadd.f32 %v948, %v1109
        %v1157 = vadd.f32 %v950, %v1111
        %v1158 = vadd.f32 %v953, %v1114
        %v1159 = vadd.f32 %v955, %v1116
        %v1160 = vadd.f32 %v958, %v1119
        %v1161 = vadd.f32 %v960, %v1121
        %v1162 = vadd.f32 %v963, %v1124
        %v1163 = vadd.f32 %v965, %v1126
        %v1164 = vadd.f32 %v968, %v1129
        %v1165 = vadd.f32 %v970, %v1131
        %v1166 = vadd.f32 %v973, %v1134
        %v1167 = vadd.f32 %v975, %v1136
        %v1168 = vadd.f32 %v978, %v1139
        %v1169 = vadd.f32 %v980, %v1141
        %v1170 = vadd.f32 %v983, %v1144
        %v1171 = vadd.f32 %v985, %v1146
        %v1172 = vadd.f32 %v988, %v1149
        %s1173 = scalar_lea.vmem [#allocation7], 192
        %v1174 = vld [vmem:[%s1173] sm:$0xf]
        %v1175 = vld [vmem:[%s1173 + $0x4] sm:$0xf]
        %v1176 = vld [vmem:[%s1173 + $0x8] sm:$0xf]
        %v1177 = vld [vmem:[%s1173 + $0xc] sm:$0xf]
        %v1178 = vld [vmem:[%s1173 + $0x10] sm:$0xf]
        %v1179 = vld [vmem:[%s1173 + $0x14] sm:$0xf]
        %v1180 = vld [vmem:[%s1173 + $0x18] sm:$0xf]
        %v1181 = vld [vmem:[%s1173 + $0x1c] sm:$0xf]
        %v1182 = vld [vmem:[%s1173 + $0x20] sm:$0xf]
        %v1183 = vld [vmem:[%s1173 + $0x24] sm:$0xf]
        %v1184 = vld [vmem:[%s1173 + $0x28] sm:$0xf]
        %v1185 = vld [vmem:[%s1173 + $0x2c] sm:$0xf]
        %v1186 = vld [vmem:[%s1173 + $0x30] sm:$0xf]
        %v1187 = vld [vmem:[%s1173 + $0x34] sm:$0xf]
        %v1188 = vld [vmem:[%s1173 + $0x38] sm:$0xf]
        %v1189 = vld [vmem:[%s1173 + $0x3c] sm:$0xf]
        %v1191 = vunpack.c.l.b16 %v567
        %v1192 = vpack.c.b16 %v627, %v626
        %v1193 = vpack.c.b16 %v629, %v628
        %v1194 = vpack.c.b16 %v631, %v630
        %v1195 = vpack.c.b16 %v633, %v632
        %v1196 = vpack.c.b16 %v635, %v634
        %v1197 = vpack.c.b16 %v637, %v636
        %v1198 = vpack.c.b16 %v639, %v638
        %v1199 = vpack.c.b16 %v641, %v640
        %v1200 = vpack.c.b16 %v643, %v642
        %v1201 = vpack.c.b16 %v645, %v644
        %v1202 = vpack.c.b16 %v1191, %v646
        %vm1203 = vcmask 1044480
        %v1204 = vrot.slane %v1192, 3
        %v1205 = vrot.slane %v1193, 3
        %v1206 = vsel %vm1203, %v1204, %v1205
        %v1207 = vrot.slane %v1194, 3
        %v1208 = vsel %vm1203, %v1205, %v1207
        %v1209 = vrot.slane %v1195, 3
        %v1210 = vsel %vm1203, %v1207, %v1209
        %v1211 = vrot.slane %v1196, 3
        %v1212 = vsel %vm1203, %v1209, %v1211
        %v1213 = vrot.slane %v1197, 3
        %v1214 = vsel %vm1203, %v1211, %v1213
        %v1215 = vrot.slane %v1198, 3
        %v1216 = vsel %vm1203, %v1213, %v1215
        %v1217 = vrot.slane %v1199, 3
        %v1218 = vsel %vm1203, %v1215, %v1217
        %v1219 = vrot.slane %v1200, 3
        %v1220 = vsel %vm1203, %v1217, %v1219
        %v1221 = vrot.slane %v1201, 3
        %v1222 = vsel %vm1203, %v1219, %v1221
        %v1223 = vrot.slane %v1202, 3
        %v1224 = vsel %vm1203, %v1221, %v1223
        %v1252 = vunpack.c.l.b16 %v1174
        %v1253 = vunpack.c.l.b16 %v1175
        %v1254 = vunpack.c.l.b16 %v1176
        %v1255 = vunpack.c.l.b16 %v1177
        %v1256 = vunpack.c.l.b16 %v1178
        %v1257 = vunpack.c.l.b16 %v1179
        %v1258 = vunpack.c.l.b16 %v1180
        %v1259 = vunpack.c.l.b16 %v1181
        %v1260 = vunpack.c.l.b16 %v1182
        %v1261 = vunpack.c.l.b16 %v1183
        %v1262 = vunpack.c.l.b16 %v1184
        %v1263 = vunpack.c.l.b16 %v1185
        %v1264 = vunpack.c.l.b16 %v1186
        %v1265 = vunpack.c.l.b16 %v1187
        %v1266 = vunpack.c.l.b16 %v1188
        %v1267 = vunpack.c.l.b16 %v1189
        %v1268 = vpack.c.b16 %v1253, %v1252
        %v1269 = vpack.c.b16 %v1255, %v1254
        %v1270 = vpack.c.b16 %v1257, %v1256
        %v1271 = vpack.c.b16 %v1259, %v1258
        %v1272 = vpack.c.b16 %v1261, %v1260
        %v1273 = vpack.c.b16 %v1263, %v1262
        %v1274 = vpack.c.b16 %v1265, %v1264
        %v1275 = vpack.c.b16 %v1267, %v1266
        %1284 = vmatpush.bf16.msra.mxu0 %v1275
        %1285 = vmatpush.bf16.msra.mxu0 %v1274
        %1286 = vmatpush.bf16.msra.mxu0 %v1273
        %1287 = vmatpush.bf16.msra.mxu0 %v1272
        %1288 = vmatpush.bf16.msra.mxu0 %v1271
        %1289 = vmatpush.bf16.msra.mxu0 %v1270
        %1290 = vmatpush.bf16.msra.mxu0 %v1269
        %1291 = vmatpush.bf16.msra.mxu0 %v1268
        %1292 = vmatmul.bf16.gmra.mxu0 %v1206
        %v1293 = vpop.f32.mrf.mxu0
        %v1294 = vadd.f32 0.0, %v1293
        %v1295 = vpop.f32.mrf.mxu0
        %v1296 = vadd.f32 0.0, %v1295
        %1297 = vmatmul.bf16.gmra.mxu0 %v1208
        %v1298 = vpop.f32.mrf.mxu0
        %v1299 = vadd.f32 0.0, %v1298
        %v1300 = vpop.f32.mrf.mxu0
        %v1301 = vadd.f32 0.0, %v1300
        %1302 = vmatmul.bf16.gmra.mxu0 %v1210
        %v1303 = vpop.f32.mrf.mxu0
        %v1304 = vadd.f32 0.0, %v1303
        %v1305 = vpop.f32.mrf.mxu0
        %v1306 = vadd.f32 0.0, %v1305
        %1307 = vmatmul.bf16.gmra.mxu0 %v1212
        %v1308 = vpop.f32.mrf.mxu0
        %v1309 = vadd.f32 0.0, %v1308
        %v1310 = vpop.f32.mrf.mxu0
        %v1311 = vadd.f32 0.0, %v1310
        %1312 = vmatmul.bf16.gmra.mxu0 %v1214
        %v1313 = vpop.f32.mrf.mxu0
        %v1314 = vadd.f32 0.0, %v1313
        %v1315 = vpop.f32.mrf.mxu0
        %v1316 = vadd.f32 0.0, %v1315
        %1317 = vmatmul.bf16.gmra.mxu0 %v1216
        %v1318 = vpop.f32.mrf.mxu0
        %v1319 = vadd.f32 0.0, %v1318
        %v1320 = vpop.f32.mrf.mxu0
        %v1321 = vadd.f32 0.0, %v1320
        %1322 = vmatmul.bf16.gmra.mxu0 %v1218
        %v1323 = vpop.f32.mrf.mxu0
        %v1324 = vadd.f32 0.0, %v1323
        %v1325 = vpop.f32.mrf.mxu0
        %v1326 = vadd.f32 0.0, %v1325
        %1327 = vmatmul.bf16.gmra.mxu0 %v1220
        %v1328 = vpop.f32.mrf.mxu0
        %v1329 = vadd.f32 0.0, %v1328
        %v1330 = vpop.f32.mrf.mxu0
        %v1331 = vadd.f32 0.0, %v1330
        %1332 = vmatmul.bf16.gmra.mxu0 %v1222
        %v1333 = vpop.f32.mrf.mxu0
        %v1334 = vadd.f32 0.0, %v1333
        %v1335 = vpop.f32.mrf.mxu0
        %v1336 = vadd.f32 0.0, %v1335
        %1337 = vmatmul.bf16.gmra.mxu0 %v1224
        %v1338 = vpop.f32.mrf.mxu0
        %v1339 = vadd.f32 0.0, %v1338
        %v1340 = vpop.f32.mrf.mxu0
        %v1341 = vadd.f32 0.0, %v1340
        %1342 = vmatmul.bf16.gmra.mxu0 %v1223
        %v1343 = vpop.f32.mrf.mxu0
        %v1344 = vadd.f32 0.0, %v1343
        %v1345 = vpop.f32.mrf.mxu0
        %1346 = vdwg.mxu0
        %v1347 = vadd.f32 %v1152, %v1294
        %v1348 = vadd.f32 %v1153, %v1296
        %v1349 = vadd.f32 %v1154, %v1299
        %v1350 = vadd.f32 %v1155, %v1301
        %v1351 = vadd.f32 %v1156, %v1304
        %v1352 = vadd.f32 %v1157, %v1306
        %v1353 = vadd.f32 %v1158, %v1309
        %v1354 = vadd.f32 %v1159, %v1311
        %v1355 = vadd.f32 %v1160, %v1314
        %v1356 = vadd.f32 %v1161, %v1316
        %v1357 = vadd.f32 %v1162, %v1319
        %v1358 = vadd.f32 %v1163, %v1321
        %v1359 = vadd.f32 %v1164, %v1324
        %v1360 = vadd.f32 %v1165, %v1326
        %v1361 = vadd.f32 %v1166, %v1329
        %v1362 = vadd.f32 %v1167, %v1331
        %v1363 = vadd.f32 %v1168, %v1334
        %v1364 = vadd.f32 %v1169, %v1336
        %v1365 = vadd.f32 %v1170, %v1339
        %v1366 = vadd.f32 %v1171, %v1341
        %v1367 = vadd.f32 %v1172, %v1344
        %s1368 = scalar_lea.vmem [#allocation7], 256
        %v1369 = vld [vmem:[%s1368] sm:$0xf]
        %v1370 = vld [vmem:[%s1368 + $0x4] sm:$0xf]
        %v1371 = vld [vmem:[%s1368 + $0x8] sm:$0xf]
        %v1372 = vld [vmem:[%s1368 + $0xc] sm:$0xf]
        %v1373 = vld [vmem:[%s1368 + $0x10] sm:$0xf]
        %v1374 = vld [vmem:[%s1368 + $0x14] sm:$0xf]
        %v1375 = vld [vmem:[%s1368 + $0x18] sm:$0xf]
        %v1376 = vld [vmem:[%s1368 + $0x1c] sm:$0xf]
        %v1377 = vld [vmem:[%s1368 + $0x20] sm:$0xf]
        %v1378 = vld [vmem:[%s1368 + $0x24] sm:$0xf]
        %v1379 = vld [vmem:[%s1368 + $0x28] sm:$0xf]
        %v1380 = vld [vmem:[%s1368 + $0x2c] sm:$0xf]
        %v1381 = vld [vmem:[%s1368 + $0x30] sm:$0xf]
        %v1382 = vld [vmem:[%s1368 + $0x34] sm:$0xf]
        %v1383 = vld [vmem:[%s1368 + $0x38] sm:$0xf]
        %v1384 = vld [vmem:[%s1368 + $0x3c] sm:$0xf]
        %vm1385 = vsmask.f32 4352
        %v1387 = vshrl.u32 %v1192, 16
        %v1389 = vrot.slane %v1387, 3
        %v1390 = vshll.u32 %v1192, 16
        %v1392 = vrot.slane %v1390, 4
        %v1393 = vor.u32 %v1389, %v1392
        %v1395 = vshrl.u32 %v1193, 16
        %v1397 = vrot.slane %v1395, 3
        %v1398 = vshll.u32 %v1193, 16
        %v1400 = vrot.slane %v1398, 4
        %v1401 = vor.u32 %v1397, %v1400
        %v1402 = vsel %vm1385, %v1393, %v1401
        %v1404 = vshrl.u32 %v1194, 16
        %v1406 = vrot.slane %v1404, 3
        %v1407 = vshll.u32 %v1194, 16
        %v1409 = vrot.slane %v1407, 4
        %v1410 = vor.u32 %v1406, %v1409
        %v1411 = vsel %vm1385, %v1401, %v1410
        %v1413 = vshrl.u32 %v1195, 16
        %v1415 = vrot.slane %v1413, 3
        %v1416 = vshll.u32 %v1195, 16
        %v1418 = vrot.slane %v1416, 4
        %v1419 = vor.u32 %v1415, %v1418
        %v1420 = vsel %vm1385, %v1410, %v1419
        %v1422 = vshrl.u32 %v1196, 16
        %v1424 = vrot.slane %v1422, 3
        %v1425 = vshll.u32 %v1196, 16
        %v1427 = vrot.slane %v1425, 4
        %v1428 = vor.u32 %v1424, %v1427
        %v1429 = vsel %vm1385, %v1419, %v1428
        %v1431 = vshrl.u32 %v1197, 16
        %v1433 = vrot.slane %v1431, 3
        %v1434 = vshll.u32 %v1197, 16
        %v1436 = vrot.slane %v1434, 4
        %v1437 = vor.u32 %v1433, %v1436
        %v1438 = vsel %vm1385, %v1428, %v1437
        %v1440 = vshrl.u32 %v1198, 16
        %v1442 = vrot.slane %v1440, 3
        %v1443 = vshll.u32 %v1198, 16
        %v1445 = vrot.slane %v1443, 4
        %v1446 = vor.u32 %v1442, %v1445
        %v1447 = vsel %vm1385, %v1437, %v1446
        %v1449 = vshrl.u32 %v1199, 16
        %v1451 = vrot.slane %v1449, 3
        %v1452 = vshll.u32 %v1199, 16
        %v1454 = vrot.slane %v1452, 4
        %v1455 = vor.u32 %v1451, %v1454
        %v1456 = vsel %vm1385, %v1446, %v1455
        %v1458 = vshrl.u32 %v1200, 16
        %v1460 = vrot.slane %v1458, 3
        %v1461 = vshll.u32 %v1200, 16
        %v1463 = vrot.slane %v1461, 4
        %v1464 = vor.u32 %v1460, %v1463
        %v1465 = vsel %vm1385, %v1455, %v1464
        %v1467 = vshrl.u32 %v1201, 16
        %v1469 = vrot.slane %v1467, 3
        %v1470 = vshll.u32 %v1201, 16
        %v1472 = vrot.slane %v1470, 4
        %v1473 = vor.u32 %v1469, %v1472
        %v1474 = vsel %vm1385, %v1464, %v1473
        %v1476 = vshrl.u32 %v1202, 16
        %v1478 = vrot.slane %v1476, 3
        %v1479 = vshll.u32 %v1202, 16
        %v1481 = vrot.slane %v1479, 4
        %v1482 = vor.u32 %v1478, %v1481
        %v1483 = vsel %vm1385, %v1473, %v1482
        %v1511 = vunpack.c.l.b16 %v1369
        %v1512 = vunpack.c.l.b16 %v1370
        %v1513 = vunpack.c.l.b16 %v1371
        %v1514 = vunpack.c.l.b16 %v1372
        %v1515 = vunpack.c.l.b16 %v1373
        %v1516 = vunpack.c.l.b16 %v1374
        %v1517 = vunpack.c.l.b16 %v1375
        %v1518 = vunpack.c.l.b16 %v1376
        %v1519 = vunpack.c.l.b16 %v1377
        %v1520 = vunpack.c.l.b16 %v1378
        %v1521 = vunpack.c.l.b16 %v1379
        %v1522 = vunpack.c.l.b16 %v1380
        %v1523 = vunpack.c.l.b16 %v1381
        %v1524 = vunpack.c.l.b16 %v1382
        %v1525 = vunpack.c.l.b16 %v1383
        %v1526 = vunpack.c.l.b16 %v1384
        %v1527 = vpack.c.b16 %v1512, %v1511
        %v1528 = vpack.c.b16 %v1514, %v1513
        %v1529 = vpack.c.b16 %v1516, %v1515
        %v1530 = vpack.c.b16 %v1518, %v1517
        %v1531 = vpack.c.b16 %v1520, %v1519
        %v1532 = vpack.c.b16 %v1522, %v1521
        %v1533 = vpack.c.b16 %v1524, %v1523
        %v1534 = vpack.c.b16 %v1526, %v1525
        %1543 = vmatpush.bf16.msra.mxu0 %v1534
        %1544 = vmatpush.bf16.msra.mxu0 %v1533
        %1545 = vmatpush.bf16.msra.mxu0 %v1532
        %1546 = vmatpush.bf16.msra.mxu0 %v1531
        %1547 = vmatpush.bf16.msra.mxu0 %v1530
        %1548 = vmatpush.bf16.msra.mxu0 %v1529
        %1549 = vmatpush.bf16.msra.mxu0 %v1528
        %1550 = vmatpush.bf16.msra.mxu0 %v1527
        %1551 = vmatmul.bf16.gmra.mxu0 %v1402
        %v1552 = vpop.f32.mrf.mxu0
        %v1553 = vadd.f32 0.0, %v1552
        %v1554 = vpop.f32.mrf.mxu0
        %v1555 = vadd.f32 0.0, %v1554
        %1556 = vmatmul.bf16.gmra.mxu0 %v1411
        %v1557 = vpop.f32.mrf.mxu0
        %v1558 = vadd.f32 0.0, %v1557
        %v1559 = vpop.f32.mrf.mxu0
        %v1560 = vadd.f32 0.0, %v1559
        %1561 = vmatmul.bf16.gmra.mxu0 %v1420
        %v1562 = vpop.f32.mrf.mxu0
        %v1563 = vadd.f32 0.0, %v1562
        %v1564 = vpop.f32.mrf.mxu0
        %v1565 = vadd.f32 0.0, %v1564
        %1566 = vmatmul.bf16.gmra.mxu0 %v1429
        %v1567 = vpop.f32.mrf.mxu0
        %v1568 = vadd.f32 0.0, %v1567
        %v1569 = vpop.f32.mrf.mxu0
        %v1570 = vadd.f32 0.0, %v1569
        %1571 = vmatmul.bf16.gmra.mxu0 %v1438
        %v1572 = vpop.f32.mrf.mxu0
        %v1573 = vadd.f32 0.0, %v1572
        %v1574 = vpop.f32.mrf.mxu0
        %v1575 = vadd.f32 0.0, %v1574
        %1576 = vmatmul.bf16.gmra.mxu0 %v1447
        %v1577 = vpop.f32.mrf.mxu0
        %v1578 = vadd.f32 0.0, %v1577
        %v1579 = vpop.f32.mrf.mxu0
        %v1580 = vadd.f32 0.0, %v1579
        %1581 = vmatmul.bf16.gmra.mxu0 %v1456
        %v1582 = vpop.f32.mrf.mxu0
        %v1583 = vadd.f32 0.0, %v1582
        %v1584 = vpop.f32.mrf.mxu0
        %v1585 = vadd.f32 0.0, %v1584
        %1586 = vmatmul.bf16.gmra.mxu0 %v1465
        %v1587 = vpop.f32.mrf.mxu0
        %v1588 = vadd.f32 0.0, %v1587
        %v1589 = vpop.f32.mrf.mxu0
        %v1590 = vadd.f32 0.0, %v1589
        %1591 = vmatmul.bf16.gmra.mxu0 %v1474
        %v1592 = vpop.f32.mrf.mxu0
        %v1593 = vadd.f32 0.0, %v1592
        %v1594 = vpop.f32.mrf.mxu0
        %v1595 = vadd.f32 0.0, %v1594
        %1596 = vmatmul.bf16.gmra.mxu0 %v1483
        %v1597 = vpop.f32.mrf.mxu0
        %v1598 = vadd.f32 0.0, %v1597
        %v1599 = vpop.f32.mrf.mxu0
        %v1600 = vadd.f32 0.0, %v1599
        %1601 = vmatmul.bf16.gmra.mxu0 %v1482
        %v1602 = vpop.f32.mrf.mxu0
        %v1603 = vadd.f32 0.0, %v1602
        %v1604 = vpop.f32.mrf.mxu0
        %1605 = vdwg.mxu0
        %v1606 = vadd.f32 %v1347, %v1553
        %v1607 = vadd.f32 %v1348, %v1555
        %v1608 = vadd.f32 %v1349, %v1558
        %v1609 = vadd.f32 %v1350, %v1560
        %v1610 = vadd.f32 %v1351, %v1563
        %v1611 = vadd.f32 %v1352, %v1565
        %v1612 = vadd.f32 %v1353, %v1568
        %v1613 = vadd.f32 %v1354, %v1570
        %v1614 = vadd.f32 %v1355, %v1573
        %v1615 = vadd.f32 %v1356, %v1575
        %v1616 = vadd.f32 %v1357, %v1578
        %v1617 = vadd.f32 %v1358, %v1580
        %v1618 = vadd.f32 %v1359, %v1583
        %v1619 = vadd.f32 %v1360, %v1585
        %v1620 = vadd.f32 %v1361, %v1588
        %v1621 = vadd.f32 %v1362, %v1590
        %v1622 = vadd.f32 %v1363, %v1593
        %v1623 = vadd.f32 %v1364, %v1595
        %v1624 = vadd.f32 %v1365, %v1598
        %v1625 = vadd.f32 %v1366, %v1600
        %v1626 = vadd.f32 %v1367, %v1603
        %s1627 = scalar_lea.vmem [#allocation7], 320
        %v1628 = vld [vmem:[%s1627] sm:$0xf]
        %v1629 = vld [vmem:[%s1627 + $0x4] sm:$0xf]
        %v1630 = vld [vmem:[%s1627 + $0x8] sm:$0xf]
        %v1631 = vld [vmem:[%s1627 + $0xc] sm:$0xf]
        %v1632 = vld [vmem:[%s1627 + $0x10] sm:$0xf]
        %v1633 = vld [vmem:[%s1627 + $0x14] sm:$0xf]
        %v1634 = vld [vmem:[%s1627 + $0x18] sm:$0xf]
        %v1635 = vld [vmem:[%s1627 + $0x1c] sm:$0xf]
        %v1636 = vld [vmem:[%s1627 + $0x20] sm:$0xf]
        %v1637 = vld [vmem:[%s1627 + $0x24] sm:$0xf]
        %v1638 = vld [vmem:[%s1627 + $0x28] sm:$0xf]
        %v1639 = vld [vmem:[%s1627 + $0x2c] sm:$0xf]
        %v1640 = vld [vmem:[%s1627 + $0x30] sm:$0xf]
        %v1641 = vld [vmem:[%s1627 + $0x34] sm:$0xf]
        %v1642 = vld [vmem:[%s1627 + $0x38] sm:$0xf]
        %v1643 = vld [vmem:[%s1627 + $0x3c] sm:$0xf]
        %v1644 = vpack.c.b16 %v1191, %v1191
        %v1663 = vunpack.c.l.b16 %v1628
        %v1664 = vunpack.c.l.b16 %v1629
        %v1665 = vunpack.c.l.b16 %v1630
        %v1666 = vunpack.c.l.b16 %v1631
        %v1667 = vunpack.c.l.b16 %v1632
        %v1668 = vunpack.c.l.b16 %v1633
        %v1669 = vunpack.c.l.b16 %v1634
        %v1670 = vunpack.c.l.b16 %v1635
        %v1671 = vunpack.c.l.b16 %v1636
        %v1672 = vunpack.c.l.b16 %v1637
        %v1673 = vunpack.c.l.b16 %v1638
        %v1674 = vunpack.c.l.b16 %v1639
        %v1675 = vunpack.c.l.b16 %v1640
        %v1676 = vunpack.c.l.b16 %v1641
        %v1677 = vunpack.c.l.b16 %v1642
        %v1678 = vunpack.c.l.b16 %v1643
        %v1679 = vpack.c.b16 %v1664, %v1663
        %v1680 = vpack.c.b16 %v1666, %v1665
        %v1681 = vpack.c.b16 %v1668, %v1667
        %v1682 = vpack.c.b16 %v1670, %v1669
        %v1683 = vpack.c.b16 %v1672, %v1671
        %v1684 = vpack.c.b16 %v1674, %v1673
        %v1685 = vpack.c.b16 %v1676, %v1675
        %v1686 = vpack.c.b16 %v1678, %v1677
        %1695 = vmatpush.bf16.msra.mxu0 %v1686
        %1696 = vmatpush.bf16.msra.mxu0 %v1685
        %1697 = vmatpush.bf16.msra.mxu0 %v1684
        %1698 = vmatpush.bf16.msra.mxu0 %v1683
        %1699 = vmatpush.bf16.msra.mxu0 %v1682
        %1700 = vmatpush.bf16.msra.mxu0 %v1681
        %1701 = vmatpush.bf16.msra.mxu0 %v1680
        %1702 = vmatpush.bf16.msra.mxu0 %v1679
        %1703 = vmatmul.bf16.gmra.mxu0 %v648
        %v1704 = vpop.f32.mrf.mxu0
        %v1705 = vadd.f32 0.0, %v1704
        %v1706 = vpop.f32.mrf.mxu0
        %v1707 = vadd.f32 0.0, %v1706
        %1708 = vmatmul.bf16.gmra.mxu0 %v649
        %v1709 = vpop.f32.mrf.mxu0
        %v1710 = vadd.f32 0.0, %v1709
        %v1711 = vpop.f32.mrf.mxu0
        %v1712 = vadd.f32 0.0, %v1711
        %1713 = vmatmul.bf16.gmra.mxu0 %v650
        %v1714 = vpop.f32.mrf.mxu0
        %v1715 = vadd.f32 0.0, %v1714
        %v1716 = vpop.f32.mrf.mxu0
        %v1717 = vadd.f32 0.0, %v1716
        %1718 = vmatmul.bf16.gmra.mxu0 %v651
        %v1719 = vpop.f32.mrf.mxu0
        %v1720 = vadd.f32 0.0, %v1719
        %v1721 = vpop.f32.mrf.mxu0
        %v1722 = vadd.f32 0.0, %v1721
        %1723 = vmatmul.bf16.gmra.mxu0 %v652
        %v1724 = vpop.f32.mrf.mxu0
        %v1725 = vadd.f32 0.0, %v1724
        %v1726 = vpop.f32.mrf.mxu0
        %v1727 = vadd.f32 0.0, %v1726
        %1728 = vmatmul.bf16.gmra.mxu0 %v653
        %v1729 = vpop.f32.mrf.mxu0
        %v1730 = vadd.f32 0.0, %v1729
        %v1731 = vpop.f32.mrf.mxu0
        %v1732 = vadd.f32 0.0, %v1731
        %1733 = vmatmul.bf16.gmra.mxu0 %v654
        %v1734 = vpop.f32.mrf.mxu0
        %v1735 = vadd.f32 0.0, %v1734
        %v1736 = vpop.f32.mrf.mxu0
        %v1737 = vadd.f32 0.0, %v1736
        %1738 = vmatmul.bf16.gmra.mxu0 %v655
        %v1739 = vpop.f32.mrf.mxu0
        %v1740 = vadd.f32 0.0, %v1739
        %v1741 = vpop.f32.mrf.mxu0
        %v1742 = vadd.f32 0.0, %v1741
        %1743 = vmatmul.bf16.gmra.mxu0 %v656
        %v1744 = vpop.f32.mrf.mxu0
        %v1745 = vadd.f32 0.0, %v1744
        %v1746 = vpop.f32.mrf.mxu0
        %v1747 = vadd.f32 0.0, %v1746
        %1748 = vmatmul.bf16.gmra.mxu0 %v657
        %v1749 = vpop.f32.mrf.mxu0
        %v1750 = vadd.f32 0.0, %v1749
        %v1751 = vpop.f32.mrf.mxu0
        %v1752 = vadd.f32 0.0, %v1751
        %1753 = vmatmul.bf16.gmra.mxu0 %v1644
        %v1754 = vpop.f32.mrf.mxu0
        %v1755 = vadd.f32 0.0, %v1754
        %v1756 = vpop.f32.mrf.mxu0
        %1757 = vdwg.mxu0
        %v1758 = vadd.f32 %v1606, %v1705
        %v1759 = vadd.f32 %v1607, %v1707
        %v1760 = vadd.f32 %v1608, %v1710
        %v1761 = vadd.f32 %v1609, %v1712
        %v1762 = vadd.f32 %v1610, %v1715
        %v1763 = vadd.f32 %v1611, %v1717
        %v1764 = vadd.f32 %v1612, %v1720
        %v1765 = vadd.f32 %v1613, %v1722
        %v1766 = vadd.f32 %v1614, %v1725
        %v1767 = vadd.f32 %v1615, %v1727
        %v1768 = vadd.f32 %v1616, %v1730
        %v1769 = vadd.f32 %v1617, %v1732
        %v1770 = vadd.f32 %v1618, %v1735
        %v1771 = vadd.f32 %v1619, %v1737
        %v1772 = vadd.f32 %v1620, %v1740
        %v1773 = vadd.f32 %v1621, %v1742
        %v1774 = vadd.f32 %v1622, %v1745
        %v1775 = vadd.f32 %v1623, %v1747
        %v1776 = vadd.f32 %v1624, %v1750
        %v1777 = vadd.f32 %v1625, %v1752
        %v1778 = vadd.f32 %v1626, %v1755
        %s1779 = scalar_lea.vmem [#allocation7], 384
        %v1780 = vld [vmem:[%s1779] sm:$0xf]
        %v1781 = vld [vmem:[%s1779 + $0x4] sm:$0xf]
        %v1782 = vld [vmem:[%s1779 + $0x8] sm:$0xf]
        %v1783 = vld [vmem:[%s1779 + $0xc] sm:$0xf]
        %v1784 = vld [vmem:[%s1779 + $0x10] sm:$0xf]
        %v1785 = vld [vmem:[%s1779 + $0x14] sm:$0xf]
        %v1786 = vld [vmem:[%s1779 + $0x18] sm:$0xf]
        %v1787 = vld [vmem:[%s1779 + $0x1c] sm:$0xf]
        %v1788 = vld [vmem:[%s1779 + $0x20] sm:$0xf]
        %v1789 = vld [vmem:[%s1779 + $0x24] sm:$0xf]
        %v1790 = vld [vmem:[%s1779 + $0x28] sm:$0xf]
        %v1791 = vld [vmem:[%s1779 + $0x2c] sm:$0xf]
        %v1792 = vld [vmem:[%s1779 + $0x30] sm:$0xf]
        %v1793 = vld [vmem:[%s1779 + $0x34] sm:$0xf]
        %v1794 = vld [vmem:[%s1779 + $0x38] sm:$0xf]
        %v1795 = vld [vmem:[%s1779 + $0x3c] sm:$0xf]
        %v1798 = vunpack.c.l.b16 %v568
        %v1799 = vunpack.c.l.b16 %v569
        %v1800 = vpack.c.b16 %v1799, %v1798
        %vm1801 = vcmask 1045504
        %v1802 = vrot.slane %v1193, 2
        %v1803 = vrot.slane %v1194, 2
        %v1804 = vsel %vm1801, %v1802, %v1803
        %v1805 = vrot.slane %v1195, 2
        %v1806 = vsel %vm1801, %v1803, %v1805
        %v1807 = vrot.slane %v1196, 2
        %v1808 = vsel %vm1801, %v1805, %v1807
        %v1809 = vrot.slane %v1197, 2
        %v1810 = vsel %vm1801, %v1807, %v1809
        %v1811 = vrot.slane %v1198, 2
        %v1812 = vsel %vm1801, %v1809, %v1811
        %v1813 = vrot.slane %v1199, 2
        %v1814 = vsel %vm1801, %v1811, %v1813
        %v1815 = vrot.slane %v1200, 2
        %v1816 = vsel %vm1801, %v1813, %v1815
        %v1817 = vrot.slane %v1201, 2
        %v1818 = vsel %vm1801, %v1815, %v1817
        %v1819 = vrot.slane %v1202, 2
        %v1820 = vsel %vm1801, %v1817, %v1819
        %v1821 = vrot.slane %v1800, 2
        %v1822 = vsel %vm1801, %v1819, %v1821
        %v1850 = vunpack.c.l.b16 %v1780
        %v1851 = vunpack.c.l.b16 %v1781
        %v1852 = vunpack.c.l.b16 %v1782
        %v1853 = vunpack.c.l.b16 %v1783
        %v1854 = vunpack.c.l.b16 %v1784
        %v1855 = vunpack.c.l.b16 %v1785
        %v1856 = vunpack.c.l.b16 %v1786
        %v1857 = vunpack.c.l.b16 %v1787
        %v1858 = vunpack.c.l.b16 %v1788
        %v1859 = vunpack.c.l.b16 %v1789
        %v1860 = vunpack.c.l.b16 %v1790
        %v1861 = vunpack.c.l.b16 %v1791
        %v1862 = vunpack.c.l.b16 %v1792
        %v1863 = vunpack.c.l.b16 %v1793
        %v1864 = vunpack.c.l.b16 %v1794
        %v1865 = vunpack.c.l.b16 %v1795
        %v1866 = vpack.c.b16 %v1851, %v1850
        %v1867 = vpack.c.b16 %v1853, %v1852
        %v1868 = vpack.c.b16 %v1855, %v1854
        %v1869 = vpack.c.b16 %v1857, %v1856
        %v1870 = vpack.c.b16 %v1859, %v1858
        %v1871 = vpack.c.b16 %v1861, %v1860
        %v1872 = vpack.c.b16 %v1863, %v1862
        %v1873 = vpack.c.b16 %v1865, %v1864
        %1882 = vmatpush.bf16.msra.mxu0 %v1873
        %1883 = vmatpush.bf16.msra.mxu0 %v1872
        %1884 = vmatpush.bf16.msra.mxu0 %v1871
        %1885 = vmatpush.bf16.msra.mxu0 %v1870
        %1886 = vmatpush.bf16.msra.mxu0 %v1869
        %1887 = vmatpush.bf16.msra.mxu0 %v1868
        %1888 = vmatpush.bf16.msra.mxu0 %v1867
        %1889 = vmatpush.bf16.msra.mxu0 %v1866
        %1890 = vmatmul.bf16.gmra.mxu0 %v1804
        %v1891 = vpop.f32.mrf.mxu0
        %v1892 = vadd.f32 0.0, %v1891
        %v1893 = vpop.f32.mrf.mxu0
        %v1894 = vadd.f32 0.0, %v1893
        %1895 = vmatmul.bf16.gmra.mxu0 %v1806
        %v1896 = vpop.f32.mrf.mxu0
        %v1897 = vadd.f32 0.0, %v1896
        %v1898 = vpop.f32.mrf.mxu0
        %v1899 = vadd.f32 0.0, %v1898
        %1900 = vmatmul.bf16.gmra.mxu0 %v1808
        %v1901 = vpop.f32.mrf.mxu0
        %v1902 = vadd.f32 0.0, %v1901
        %v1903 = vpop.f32.mrf.mxu0
        %v1904 = vadd.f32 0.0, %v1903
        %1905 = vmatmul.bf16.gmra.mxu0 %v1810
        %v1906 = vpop.f32.mrf.mxu0
        %v1907 = vadd.f32 0.0, %v1906
        %v1908 = vpop.f32.mrf.mxu0
        %v1909 = vadd.f32 0.0, %v1908
        %1910 = vmatmul.bf16.gmra.mxu0 %v1812
        %v1911 = vpop.f32.mrf.mxu0
        %v1912 = vadd.f32 0.0, %v1911
        %v1913 = vpop.f32.mrf.mxu0
        %v1914 = vadd.f32 0.0, %v1913
        %1915 = vmatmul.bf16.gmra.mxu0 %v1814
        %v1916 = vpop.f32.mrf.mxu0
        %v1917 = vadd.f32 0.0, %v1916
        %v1918 = vpop.f32.mrf.mxu0
        %v1919 = vadd.f32 0.0, %v1918
        %1920 = vmatmul.bf16.gmra.mxu0 %v1816
        %v1921 = vpop.f32.mrf.mxu0
        %v1922 = vadd.f32 0.0, %v1921
        %v1923 = vpop.f32.mrf.mxu0
        %v1924 = vadd.f32 0.0, %v1923
        %1925 = vmatmul.bf16.gmra.mxu0 %v1818
        %v1926 = vpop.f32.mrf.mxu0
        %v1927 = vadd.f32 0.0, %v1926
        %v1928 = vpop.f32.mrf.mxu0
        %v1929 = vadd.f32 0.0, %v1928
        %1930 = vmatmul.bf16.gmra.mxu0 %v1820
        %v1931 = vpop.f32.mrf.mxu0
        %v1932 = vadd.f32 0.0, %v1931
        %v1933 = vpop.f32.mrf.mxu0
        %v1934 = vadd.f32 0.0, %v1933
        %1935 = vmatmul.bf16.gmra.mxu0 %v1822
        %v1936 = vpop.f32.mrf.mxu0
        %v1937 = vadd.f32 0.0, %v1936
        %v1938 = vpop.f32.mrf.mxu0
        %v1939 = vadd.f32 0.0, %v1938
        %1940 = vmatmul.bf16.gmra.mxu0 %v1821
        %v1941 = vpop.f32.mrf.mxu0
        %v1942 = vadd.f32 0.0, %v1941
        %v1943 = vpop.f32.mrf.mxu0
        %1944 = vdwg.mxu0
        %v1945 = vadd.f32 %v1758, %v1892
        %v1946 = vadd.f32 %v1759, %v1894
        %v1947 = vadd.f32 %v1760, %v1897
        %v1948 = vadd.f32 %v1761, %v1899
        %v1949 = vadd.f32 %v1762, %v1902
        %v1950 = vadd.f32 %v1763, %v1904
        %v1951 = vadd.f32 %v1764, %v1907
        %v1952 = vadd.f32 %v1765, %v1909
        %v1953 = vadd.f32 %v1766, %v1912
        %v1954 = vadd.f32 %v1767, %v1914
        %v1955 = vadd.f32 %v1768, %v1917
        %v1956 = vadd.f32 %v1769, %v1919
        %v1957 = vadd.f32 %v1770, %v1922
        %v1958 = vadd.f32 %v1771, %v1924
        %v1959 = vadd.f32 %v1772, %v1927
        %v1960 = vadd.f32 %v1773, %v1929
        %v1961 = vadd.f32 %v1774, %v1932
        %v1962 = vadd.f32 %v1775, %v1934
        %v1963 = vadd.f32 %v1776, %v1937
        %v1964 = vadd.f32 %v1777, %v1939
        %v1965 = vadd.f32 %v1778, %v1942
        %s1966 = scalar_lea.vmem [#allocation7], 448
        %v1967 = vld [vmem:[%s1966] sm:$0xf]
        %v1968 = vld [vmem:[%s1966 + $0x4] sm:$0xf]
        %v1969 = vld [vmem:[%s1966 + $0x8] sm:$0xf]
        %v1970 = vld [vmem:[%s1966 + $0xc] sm:$0xf]
        %v1971 = vld [vmem:[%s1966 + $0x10] sm:$0xf]
        %v1972 = vld [vmem:[%s1966 + $0x14] sm:$0xf]
        %v1973 = vld [vmem:[%s1966 + $0x18] sm:$0xf]
        %v1974 = vld [vmem:[%s1966 + $0x1c] sm:$0xf]
        %v1975 = vld [vmem:[%s1966 + $0x20] sm:$0xf]
        %v1976 = vld [vmem:[%s1966 + $0x24] sm:$0xf]
        %v1977 = vld [vmem:[%s1966 + $0x28] sm:$0xf]
        %v1978 = vld [vmem:[%s1966 + $0x2c] sm:$0xf]
        %v1979 = vld [vmem:[%s1966 + $0x30] sm:$0xf]
        %v1980 = vld [vmem:[%s1966 + $0x34] sm:$0xf]
        %v1981 = vld [vmem:[%s1966 + $0x38] sm:$0xf]
        %v1982 = vld [vmem:[%s1966 + $0x3c] sm:$0xf]
        %vm1983 = vsmask.f32 5376
        %v1984 = vrot.slane %v1395, 2
        %v1985 = vrot.slane %v1398, 3
        %v1986 = vor.u32 %v1984, %v1985
        %v1987 = vrot.slane %v1404, 2
        %v1988 = vrot.slane %v1407, 3
        %v1989 = vor.u32 %v1987, %v1988
        %v1990 = vsel %vm1983, %v1986, %v1989
        %v1991 = vrot.slane %v1413, 2
        %v1992 = vrot.slane %v1416, 3
        %v1993 = vor.u32 %v1991, %v1992
        %v1994 = vsel %vm1983, %v1989, %v1993
        %v1995 = vrot.slane %v1422, 2
        %v1996 = vrot.slane %v1425, 3
        %v1997 = vor.u32 %v1995, %v1996
        %v1998 = vsel %vm1983, %v1993, %v1997
        %v1999 = vrot.slane %v1431, 2
        %v2000 = vrot.slane %v1434, 3
        %v2001 = vor.u32 %v1999, %v2000
        %v2002 = vsel %vm1983, %v1997, %v2001
        %v2003 = vrot.slane %v1440, 2
        %v2004 = vrot.slane %v1443, 3
        %v2005 = vor.u32 %v2003, %v2004
        %v2006 = vsel %vm1983, %v2001, %v2005
        %v2007 = vrot.slane %v1449, 2
        %v2008 = vrot.slane %v1452, 3
        %v2009 = vor.u32 %v2007, %v2008
        %v2010 = vsel %vm1983, %v2005, %v2009
        %v2011 = vrot.slane %v1458, 2
        %v2012 = vrot.slane %v1461, 3
        %v2013 = vor.u32 %v2011, %v2012
        %v2014 = vsel %vm1983, %v2009, %v2013
        %v2015 = vrot.slane %v1467, 2
        %v2016 = vrot.slane %v1470, 3
        %v2017 = vor.u32 %v2015, %v2016
        %v2018 = vsel %vm1983, %v2013, %v2017
        %v2019 = vrot.slane %v1476, 2
        %v2020 = vrot.slane %v1479, 3
        %v2021 = vor.u32 %v2019, %v2020
        %v2022 = vsel %vm1983, %v2017, %v2021
        %v2024 = vshrl.u32 %v1800, 16
        %v2026 = vrot.slane %v2024, 2
        %v2027 = vshll.u32 %v1800, 16
        %v2029 = vrot.slane %v2027, 3
        %v2030 = vor.u32 %v2026, %v2029
        %v2031 = vsel %vm1983, %v2021, %v2030
        %v2059 = vunpack.c.l.b16 %v1967
        %v2060 = vunpack.c.l.b16 %v1968
        %v2061 = vunpack.c.l.b16 %v1969
        %v2062 = vunpack.c.l.b16 %v1970
        %v2063 = vunpack.c.l.b16 %v1971
        %v2064 = vunpack.c.l.b16 %v1972
        %v2065 = vunpack.c.l.b16 %v1973
        %v2066 = vunpack.c.l.b16 %v1974
        %v2067 = vunpack.c.l.b16 %v1975
        %v2068 = vunpack.c.l.b16 %v1976
        %v2069 = vunpack.c.l.b16 %v1977
        %v2070 = vunpack.c.l.b16 %v1978
        %v2071 = vunpack.c.l.b16 %v1979
        %v2072 = vunpack.c.l.b16 %v1980
        %v2073 = vunpack.c.l.b16 %v1981
        %v2074 = vunpack.c.l.b16 %v1982
        %v2075 = vpack.c.b16 %v2060, %v2059
        %v2076 = vpack.c.b16 %v2062, %v2061
        %v2077 = vpack.c.b16 %v2064, %v2063
        %v2078 = vpack.c.b16 %v2066, %v2065
        %v2079 = vpack.c.b16 %v2068, %v2067
        %v2080 = vpack.c.b16 %v2070, %v2069
        %v2081 = vpack.c.b16 %v2072, %v2071
        %v2082 = vpack.c.b16 %v2074, %v2073
        %2091 = vmatpush.bf16.msra.mxu0 %v2082
        %2092 = vmatpush.bf16.msra.mxu0 %v2081
        %2093 = vmatpush.bf16.msra.mxu0 %v2080
        %2094 = vmatpush.bf16.msra.mxu0 %v2079
        %2095 = vmatpush.bf16.msra.mxu0 %v2078
        %2096 = vmatpush.bf16.msra.mxu0 %v2077
        %2097 = vmatpush.bf16.msra.mxu0 %v2076
        %2098 = vmatpush.bf16.msra.mxu0 %v2075
        %2099 = vmatmul.bf16.gmra.mxu0 %v1990
        %v2100 = vpop.f32.mrf.mxu0
        %v2101 = vadd.f32 0.0, %v2100
        %v2102 = vpop.f32.mrf.mxu0
        %v2103 = vadd.f32 0.0, %v2102
        %2104 = vmatmul.bf16.gmra.mxu0 %v1994
        %v2105 = vpop.f32.mrf.mxu0
        %v2106 = vadd.f32 0.0, %v2105
        %v2107 = vpop.f32.mrf.mxu0
        %v2108 = vadd.f32 0.0, %v2107
        %2109 = vmatmul.bf16.gmra.mxu0 %v1998
        %v2110 = vpop.f32.mrf.mxu0
        %v2111 = vadd.f32 0.0, %v2110
        %v2112 = vpop.f32.mrf.mxu0
        %v2113 = vadd.f32 0.0, %v2112
        %2114 = vmatmul.bf16.gmra.mxu0 %v2002
        %v2115 = vpop.f32.mrf.mxu0
        %v2116 = vadd.f32 0.0, %v2115
        %v2117 = vpop.f32.mrf.mxu0
        %v2118 = vadd.f32 0.0, %v2117
        %2119 = vmatmul.bf16.gmra.mxu0 %v2006
        %v2120 = vpop.f32.mrf.mxu0
        %v2121 = vadd.f32 0.0, %v2120
        %v2122 = vpop.f32.mrf.mxu0
        %v2123 = vadd.f32 0.0, %v2122
        %2124 = vmatmul.bf16.gmra.mxu0 %v2010
        %v2125 = vpop.f32.mrf.mxu0
        %v2126 = vadd.f32 0.0, %v2125
        %v2127 = vpop.f32.mrf.mxu0
        %v2128 = vadd.f32 0.0, %v2127
        %2129 = vmatmul.bf16.gmra.mxu0 %v2014
        %v2130 = vpop.f32.mrf.mxu0
        %v2131 = vadd.f32 0.0, %v2130
        %v2132 = vpop.f32.mrf.mxu0
        %v2133 = vadd.f32 0.0, %v2132
        %2134 = vmatmul.bf16.gmra.mxu0 %v2018
        %v2135 = vpop.f32.mrf.mxu0
        %v2136 = vadd.f32 0.0, %v2135
        %v2137 = vpop.f32.mrf.mxu0
        %v2138 = vadd.f32 0.0, %v2137
        %2139 = vmatmul.bf16.gmra.mxu0 %v2022
        %v2140 = vpop.f32.mrf.mxu0
        %v2141 = vadd.f32 0.0, %v2140
        %v2142 = vpop.f32.mrf.mxu0
        %v2143 = vadd.f32 0.0, %v2142
        %2144 = vmatmul.bf16.gmra.mxu0 %v2031
        %v2145 = vpop.f32.mrf.mxu0
        %v2146 = vadd.f32 0.0, %v2145
        %v2147 = vpop.f32.mrf.mxu0
        %v2148 = vadd.f32 0.0, %v2147
        %2149 = vmatmul.bf16.gmra.mxu0 %v2030
        %v2150 = vpop.f32.mrf.mxu0
        %v2151 = vadd.f32 0.0, %v2150
        %v2152 = vpop.f32.mrf.mxu0
        %2153 = vdwg.mxu0
        %v2154 = vadd.f32 %v1945, %v2101
        %v2155 = vadd.f32 %v1946, %v2103
        %v2156 = vadd.f32 %v1947, %v2106
        %v2157 = vadd.f32 %v1948, %v2108
        %v2158 = vadd.f32 %v1949, %v2111
        %v2159 = vadd.f32 %v1950, %v2113
        %v2160 = vadd.f32 %v1951, %v2116
        %v2161 = vadd.f32 %v1952, %v2118
        %v2162 = vadd.f32 %v1953, %v2121
        %v2163 = vadd.f32 %v1954, %v2123
        %v2164 = vadd.f32 %v1955, %v2126
        %v2165 = vadd.f32 %v1956, %v2128
        %v2166 = vadd.f32 %v1957, %v2131
        %v2167 = vadd.f32 %v1958, %v2133
        %v2168 = vadd.f32 %v1959, %v2136
        %v2169 = vadd.f32 %v1960, %v2138
        %v2170 = vadd.f32 %v1961, %v2141
        %v2171 = vadd.f32 %v1962, %v2143
        %v2172 = vadd.f32 %v1963, %v2146
        %v2173 = vadd.f32 %v1964, %v2148
        %v2174 = vadd.f32 %v1965, %v2151
        %s2175 = scalar_lea.vmem [#allocation7], 512
        %v2176 = vld [vmem:[%s2175] sm:$0xf]
        %v2177 = vld [vmem:[%s2175 + $0x4] sm:$0xf]
        %v2178 = vld [vmem:[%s2175 + $0x8] sm:$0xf]
        %v2179 = vld [vmem:[%s2175 + $0xc] sm:$0xf]
        %v2180 = vld [vmem:[%s2175 + $0x10] sm:$0xf]
        %v2181 = vld [vmem:[%s2175 + $0x14] sm:$0xf]
        %v2182 = vld [vmem:[%s2175 + $0x18] sm:$0xf]
        %v2183 = vld [vmem:[%s2175 + $0x1c] sm:$0xf]
        %v2184 = vld [vmem:[%s2175 + $0x20] sm:$0xf]
        %v2185 = vld [vmem:[%s2175 + $0x24] sm:$0xf]
        %v2186 = vld [vmem:[%s2175 + $0x28] sm:$0xf]
        %v2187 = vld [vmem:[%s2175 + $0x2c] sm:$0xf]
        %v2188 = vld [vmem:[%s2175 + $0x30] sm:$0xf]
        %v2189 = vld [vmem:[%s2175 + $0x34] sm:$0xf]
        %v2190 = vld [vmem:[%s2175 + $0x38] sm:$0xf]
        %v2191 = vld [vmem:[%s2175 + $0x3c] sm:$0xf]
        %v2192 = vrot.slane %v1800, 3
        %v2193 = vsel %vm1203, %v1223, %v2192
        %v2212 = vunpack.c.l.b16 %v2176
        %v2213 = vunpack.c.l.b16 %v2177
        %v2214 = vunpack.c.l.b16 %v2178
        %v2215 = vunpack.c.l.b16 %v2179
        %v2216 = vunpack.c.l.b16 %v2180
        %v2217 = vunpack.c.l.b16 %v2181
        %v2218 = vunpack.c.l.b16 %v2182
        %v2219 = vunpack.c.l.b16 %v2183
        %v2220 = vunpack.c.l.b16 %v2184
        %v2221 = vunpack.c.l.b16 %v2185
        %v2222 = vunpack.c.l.b16 %v2186
        %v2223 = vunpack.c.l.b16 %v2187
        %v2224 = vunpack.c.l.b16 %v2188
        %v2225 = vunpack.c.l.b16 %v2189
        %v2226 = vunpack.c.l.b16 %v2190
        %v2227 = vunpack.c.l.b16 %v2191
        %v2228 = vpack.c.b16 %v2213, %v2212
        %v2229 = vpack.c.b16 %v2215, %v2214
        %v2230 = vpack.c.b16 %v2217, %v2216
        %v2231 = vpack.c.b16 %v2219, %v2218
        %v2232 = vpack.c.b16 %v2221, %v2220
        %v2233 = vpack.c.b16 %v2223, %v2222
        %v2234 = vpack.c.b16 %v2225, %v2224
        %v2235 = vpack.c.b16 %v2227, %v2226
        %2244 = vmatpush.bf16.msra.mxu0 %v2235
        %2245 = vmatpush.bf16.msra.mxu0 %v2234
        %2246 = vmatpush.bf16.msra.mxu0 %v2233
        %2247 = vmatpush.bf16.msra.mxu0 %v2232
        %2248 = vmatpush.bf16.msra.mxu0 %v2231
        %2249 = vmatpush.bf16.msra.mxu0 %v2230
        %2250 = vmatpush.bf16.msra.mxu0 %v2229
        %2251 = vmatpush.bf16.msra.mxu0 %v2228
        %2252 = vmatmul.bf16.gmra.mxu0 %v1208
        %v2253 = vpop.f32.mrf.mxu0
        %v2254 = vadd.f32 0.0, %v2253
        %v2255 = vpop.f32.mrf.mxu0
        %v2256 = vadd.f32 0.0, %v2255
        %2257 = vmatmul.bf16.gmra.mxu0 %v1210
        %v2258 = vpop.f32.mrf.mxu0
        %v2259 = vadd.f32 0.0, %v2258
        %v2260 = vpop.f32.mrf.mxu0
        %v2261 = vadd.f32 0.0, %v2260
        %2262 = vmatmul.bf16.gmra.mxu0 %v1212
        %v2263 = vpop.f32.mrf.mxu0
        %v2264 = vadd.f32 0.0, %v2263
        %v2265 = vpop.f32.mrf.mxu0
        %v2266 = vadd.f32 0.0, %v2265
        %2267 = vmatmul.bf16.gmra.mxu0 %v1214
        %v2268 = vpop.f32.mrf.mxu0
        %v2269 = vadd.f32 0.0, %v2268
        %v2270 = vpop.f32.mrf.mxu0
        %v2271 = vadd.f32 0.0, %v2270
        %2272 = vmatmul.bf16.gmra.mxu0 %v1216
        %v2273 = vpop.f32.mrf.mxu0
        %v2274 = vadd.f32 0.0, %v2273
        %v2275 = vpop.f32.mrf.mxu0
        %v2276 = vadd.f32 0.0, %v2275
        %2277 = vmatmul.bf16.gmra.mxu0 %v1218
        %v2278 = vpop.f32.mrf.mxu0
        %v2279 = vadd.f32 0.0, %v2278
        %v2280 = vpop.f32.mrf.mxu0
        %v2281 = vadd.f32 0.0, %v2280
        %2282 = vmatmul.bf16.gmra.mxu0 %v1220
        %v2283 = vpop.f32.mrf.mxu0
        %v2284 = vadd.f32 0.0, %v2283
        %v2285 = vpop.f32.mrf.mxu0
        %v2286 = vadd.f32 0.0, %v2285
        %2287 = vmatmul.bf16.gmra.mxu0 %v1222
        %v2288 = vpop.f32.mrf.mxu0
        %v2289 = vadd.f32 0.0, %v2288
        %v2290 = vpop.f32.mrf.mxu0
        %v2291 = vadd.f32 0.0, %v2290
        %2292 = vmatmul.bf16.gmra.mxu0 %v1224
        %v2293 = vpop.f32.mrf.mxu0
        %v2294 = vadd.f32 0.0, %v2293
        %v2295 = vpop.f32.mrf.mxu0
        %v2296 = vadd.f32 0.0, %v2295
        %2297 = vmatmul.bf16.gmra.mxu0 %v2193
        %v2298 = vpop.f32.mrf.mxu0
        %v2299 = vadd.f32 0.0, %v2298
        %v2300 = vpop.f32.mrf.mxu0
        %v2301 = vadd.f32 0.0, %v2300
        %2302 = vmatmul.bf16.gmra.mxu0 %v2192
        %v2303 = vpop.f32.mrf.mxu0
        %v2304 = vadd.f32 0.0, %v2303
        %v2305 = vpop.f32.mrf.mxu0
        %2306 = vdwg.mxu0
        %v2307 = vadd.f32 %v2154, %v2254
        %v2308 = vadd.f32 %v2155, %v2256
        %v2309 = vadd.f32 %v2156, %v2259
        %v2310 = vadd.f32 %v2157, %v2261
        %v2311 = vadd.f32 %v2158, %v2264
        %v2312 = vadd.f32 %v2159, %v2266
        %v2313 = vadd.f32 %v2160, %v2269
        %v2314 = vadd.f32 %v2161, %v2271
        %v2315 = vadd.f32 %v2162, %v2274
        %v2316 = vadd.f32 %v2163, %v2276
        %v2317 = vadd.f32 %v2164, %v2279
        %v2318 = vadd.f32 %v2165, %v2281
        %v2319 = vadd.f32 %v2166, %v2284
        %v2320 = vadd.f32 %v2167, %v2286
        %v2321 = vadd.f32 %v2168, %v2289
        %v2322 = vadd.f32 %v2169, %v2291
        %v2323 = vadd.f32 %v2170, %v2294
        %v2324 = vadd.f32 %v2171, %v2296
        %v2325 = vadd.f32 %v2172, %v2299
        %v2326 = vadd.f32 %v2173, %v2301
        %v2327 = vadd.f32 %v2174, %v2304
        %v2328 = vld [vmem:[%s4] sm:$0x1]
        %v2330 = vperm.slane %v2328, 0
        %v2332 = vadd.f32 %v2307, %v2330
        %v2333 = vadd.f32 %v2308, %v2330
        %v2334 = vadd.f32 %v2309, %v2330
        %v2335 = vadd.f32 %v2310, %v2330
        %v2336 = vadd.f32 %v2311, %v2330
        %v2337 = vadd.f32 %v2312, %v2330
        %v2338 = vadd.f32 %v2313, %v2330
        %v2339 = vadd.f32 %v2314, %v2330
        %v2340 = vadd.f32 %v2315, %v2330
        %v2341 = vadd.f32 %v2316, %v2330
        %v2342 = vadd.f32 %v2317, %v2330
        %v2343 = vadd.f32 %v2318, %v2330
        %v2344 = vadd.f32 %v2319, %v2330
        %v2345 = vadd.f32 %v2320, %v2330
        %v2346 = vadd.f32 %v2321, %v2330
        %v2347 = vadd.f32 %v2322, %v2330
        %v2348 = vadd.f32 %v2323, %v2330
        %v2349 = vadd.f32 %v2324, %v2330
        %v2350 = vadd.f32 %v2325, %v2330
        %v2351 = vadd.f32 %v2326, %v2330
        %v2352 = vadd.f32 %v2327, %v2330
        %v2353 = vmax.f32 %v2332, 0.0
        %v2354 = vmax.f32 %v2333, 0.0
        %v2355 = vmax.f32 %v2334, 0.0
        %v2356 = vmax.f32 %v2335, 0.0
        %v2357 = vmax.f32 %v2336, 0.0
        %v2358 = vmax.f32 %v2337, 0.0
        %v2359 = vmax.f32 %v2338, 0.0
        %v2360 = vmax.f32 %v2339, 0.0
        %v2361 = vmax.f32 %v2340, 0.0
        %v2362 = vmax.f32 %v2341, 0.0
        %v2363 = vmax.f32 %v2342, 0.0
        %v2364 = vmax.f32 %v2343, 0.0
        %v2365 = vmax.f32 %v2344, 0.0
        %v2366 = vmax.f32 %v2345, 0.0
        %v2367 = vmax.f32 %v2346, 0.0
        %v2368 = vmax.f32 %v2347, 0.0
        %v2369 = vmax.f32 %v2348, 0.0
        %v2370 = vmax.f32 %v2349, 0.0
        %v2371 = vmax.f32 %v2350, 0.0
        %v2372 = vmax.f32 %v2351, 0.0
        %v2373 = vmax.f32 %v2352, 0.0
        %2374 = vst [vmem:[%s277] sm:$0xff] %v2353
        %2375 = vst [vmem:[%s277 + $0x8] sm:$0xff] %v2354
        %2376 = vst [vmem:[%s277 + $0x10] sm:$0xff] %v2355
        %2377 = vst [vmem:[%s277 + $0x18] sm:$0xff] %v2356
        %2378 = vst [vmem:[%s277 + $0x20] sm:$0xff] %v2357
        %2379 = vst [vmem:[%s277 + $0x28] sm:$0xff] %v2358
        %2380 = vst [vmem:[%s277 + $0x30] sm:$0xff] %v2359
        %2381 = vst [vmem:[%s277 + $0x38] sm:$0xff] %v2360
        %2382 = vst [vmem:[%s277 + $0x40] sm:$0xff] %v2361
        %2383 = vst [vmem:[%s277 + $0x48] sm:$0xff] %v2362
        %2384 = vst [vmem:[%s277 + $0x50] sm:$0xff] %v2363
        %2385 = vst [vmem:[%s277 + $0x58] sm:$0xff] %v2364
        %2386 = vst [vmem:[%s277 + $0x60] sm:$0xff] %v2365
        %2387 = vst [vmem:[%s277 + $0x68] sm:$0xff] %v2366
        %2388 = vst [vmem:[%s277 + $0x70] sm:$0xff] %v2367
        %2389 = vst [vmem:[%s277 + $0x78] sm:$0xff] %v2368
        %2390 = vst [vmem:[%s277 + $0x80] sm:$0xff] %v2369
        %2391 = vst [vmem:[%s277 + $0x88] sm:$0xff] %v2370
        %2392 = vst [vmem:[%s277 + $0x90] sm:$0xff] %v2371
        %2393 = vst [vmem:[%s277 + $0x98] sm:$0xff] %v2372
        %2394 = vst [vmem:[%s277 + $0xa0] sm:$0xff] %v2373
        %s2395 = sand.u32 %s141, 1
        %s2396 = scalar_lea.sflag [#allocation4], %s2395
        %s2397 = sand.u32 %s141, 1
        %s2398 = smul.addr %s2397, 168
        %s2399 = scalar_lea.vmem [#allocation8], %s2398
        // Predicated region
        $region53: #{tpu_custom_call.1} parent=39 // pred_check
          %p2400 = pneg %p151
        $region54: #{tpu_custom_call.1} parent=39 // pred_check_branch
          %2402 = sbr.rel (%p2400) target = $region56
        $region55: #{tpu_custom_call.1} parent=39 // pred_region
          %2404 = vsyncadd %s2396, 0
          %s2405 = smul.addr %s23, 21
          %s2406 = smul.addr %s2405, 8
          %s2407 = scalar_lea.hbm %s5, %s2406
          %s2408 = sshll.u32 %s2399, 4
          %s2409 = int_to_ptr.vmem [resolvable:$true] %s2408
          %s2410 = sshll.u32 %s2407, 4
          %s2411 = int_to_ptr.hbm [resolvable:$true] %s2410
          %2416 = dma.vmem_to_hbm [thread:$0]  %s2409, 2688, %s2411, %s2396, 128, 128, 8
        $region56: #{tpu_custom_call.1} parent=39 // pred_fallthru
          _
      $region40: #{tpu_custom_call.1} parent=5 // pred_fallthru
        _
      %p2417 = scmp.le.s32.totalorder 2, %s18
      // Predicated region
      $region57: #{tpu_custom_call.1} parent=5 // pred_check
        %p2418 = pneg %p2417
      $region58: #{tpu_custom_call.1} parent=5 // pred_check_branch
        %2420 = sbr.rel (%p2418) target = $region60
      $region59: #{tpu_custom_call.1} parent=5 // pred_region
        %s2421 = ssub.s32 %s18, 2
        // Predicated region
        $region61: #{tpu_custom_call.1} parent=59 // pred_check
          %p2422 = pneg %p157
        $region62: #{tpu_custom_call.1} parent=59 // pred_check_branch
          %2424 = sbr.rel (%p2422) target = $region64
        $region63: #{tpu_custom_call.1} parent=59 // pred_region
          %s2425 = sand.u32 %s142, 1
          %s2426 = scalar_lea.sflag [#allocation4], %s2425
          %s2427 = sand.u32 %s142, 1
          %s2428 = smul.addr %s2427, 168
          %s2429 = scalar_lea.vmem [#allocation8], %s2428
          %2431 = dma.done %s2426, 2688
        $region64: #{tpu_custom_call.1} parent=59 // pred_fallthru
          _
      $region60: #{tpu_custom_call.1} parent=5 // pred_fallthru
        _
    $region6: #{tpu_custom_call.1} parent=1 // loop_footer
      %s22 = sadd.s32 1, %s18
    $region7: #{tpu_custom_call.1} parent=1 // loop_footer_branch
      %17 = sbr.rel target = $region3
    $region8: #{tpu_custom_call.1} parent=1 // loop_exit
      _
    %2432 = vsyncpa [#allocation3], 1
    %s2433 = scalar_lea.sflag [#allocation3], 1
    %2434 = vsyncpa %s2433, 1
    %2435 = vsyncpa [#allocation6], 1
    %2436 = vsyncpa [#allocation4], 1
    %s2437 = scalar_lea.sflag [#allocation4], 1
    %2438 = vsyncpa %s2437, 1

</llo_original>
